<compile_context>
chip_gen: v6e
topology: v6e:2x2x1
jax: 0.10.0
libtpu: 0.0.40
codegen_flags: <defaults>
</compile_context>

<pallas_src>
import math
import functools

import jax
import jax.numpy as jnp
from jax import lax
from jax.experimental import pallas as pl
from jax.experimental.pallas import tpu as pltpu


def _layer_norm(v, w, b, eps=1e-5):
    mean = jnp.mean(v, axis=-1, keepdims=True)
    var = jnp.mean(jnp.square(v - mean), axis=-1, keepdims=True)   # unbiased=False
    return w * ((v - mean) * lax.rsqrt(var + eps)) + b


def _gelu_tanh(x):
    return 0.5 * x * (1.0 + jnp.tanh(jnp.sqrt(2.0 / jnp.pi) * (x + 0.044715 * x * x * x)))


def _bspec(shape, index_map, buffers=None):
    """BlockSpec with optional pipeline buffer-count; falls back gracefully."""
    if buffers is not None and hasattr(pl, "Buffered"):
        try:
            return pl.BlockSpec(shape, index_map, pipeline_mode=pl.Buffered(buffers))
        except TypeError:
            pass
    return pl.BlockSpec(shape, index_map)


def _vmem_limit_bytes():
    """Derive the scoped-VMEM limit from the chip (leave ~25% headroom)."""
    phys = 128 * 1024 * 1024
    try:
        info = pltpu.get_tpu_info()
        phys = int(getattr(info, "vmem_capacity_bytes", phys))
    except Exception:
        pass
    return max(32 * 1024 * 1024, min(int(phys * 0.75), 100 * 1024 * 1024))


# --------------------------------------------------------------------------- #
# Kernel A: transformer block body, one batch element per grid step.
# --------------------------------------------------------------------------- #
def block_kernel(x_ref,
                 ln1w_ref, ln1b_ref,
                 wqkv_ref,
                 ln2w_ref, ln2b_ref,
                 ffw1_ref, ffb1_ref, ffw2_ref, ffb2_ref,
                 y_ref,
                 *, n_heads, head_dim, ffn_chunk):
    S = x_ref.shape[1]
    E = x_ref.shape[2]
    nh, hd = n_heads, head_dim

    x = x_ref[0].astype(jnp.float32)                                  # (S, E)

    # ---- LayerNorm 1 (f32 VPU math) ----
    h = _layer_norm(x, ln1w_ref[...], ln1b_ref[...])
    hb = h.astype(jnp.bfloat16)

    # ---- fused lane-dense QKV projection: one (S,E)x(E,3E) MXU call ----
    qkv = jnp.dot(hb, wqkv_ref[...], preferred_element_type=jnp.float32)   # (S, 3E)
    scale = 1.0 / math.sqrt(hd)
    q = (qkv[:, 0 * E:1 * E] * scale).reshape(S, nh, hd)              # scale folded into q
    k = qkv[:, 1 * E:2 * E].reshape(S, nh, hd)
    v = qkv[:, 2 * E:3 * E].reshape(S, nh, hd)
    qh = jnp.transpose(q, (1, 0, 2)).astype(jnp.bfloat16)             # (nh, S, hd)
    kh = jnp.transpose(k, (1, 0, 2)).astype(jnp.bfloat16)
    vh = jnp.transpose(v, (1, 0, 2)).astype(jnp.bfloat16)

    # ---- causal attention (dense scores: fine at toy S) ----
    s = jnp.einsum('hqd,hkd->hqk', qh, kh, preferred_element_type=jnp.float32)
    row = lax.broadcasted_iota(jnp.int32, (S, S), 0)
    col = lax.broadcasted_iota(jnp.int32, (S, S), 1)
    keep = (col <= row)[None]                                         # (1, S, S)
    s = jnp.where(keep, s, -1e30)                                     # finite neg (no inf-inf)
    m = jnp.max(s, axis=-1, keepdims=True)
    e = jnp.exp(s - m)
    l = jnp.sum(e, axis=-1, keepdims=True)
    p = e * pl.reciprocal(l, approx=True)                             # EUP, not VALU divide
    ctx = jnp.einsum('hqk,hkd->hqd', p.astype(jnp.bfloat16), vh,
                     preferred_element_type=jnp.float32)              # (nh, S, hd)
    ctx = jnp.transpose(ctx, (1, 0, 2)).reshape(S, E)                 # single-transpose head merge

    x1 = x + ctx                                                      # residual 1 (dropout = id)

    # ---- LayerNorm 2 + FFN, hidden dim in lane chunks via fori_loop ----
    h2 = _layer_norm(x1, ln2w_ref[...], ln2b_ref[...])
    h2b = h2.astype(jnp.bfloat16)
    H = ffw1_ref.shape[1]
    n_chunks = H // ffn_chunk

    def ffn_body(c, acc):
        c0 = pl.multiple_of(c * ffn_chunk, ffn_chunk)
        h1 = jnp.dot(h2b, ffw1_ref[:, pl.ds(c0, ffn_chunk)],
                     preferred_element_type=jnp.float32) + ffb1_ref[:, pl.ds(c0, ffn_chunk)]
        g = _gelu_tanh(h1)                                            # f32 elementwise
        return acc + jnp.dot(g.astype(jnp.bfloat16), ffw2_ref[pl.ds(c0, ffn_chunk), :],
                             preferred_element_type=jnp.float32)

    ff = lax.fori_loop(0, n_chunks, ffn_body, jnp.zeros((S, E), jnp.float32),
                       unroll=True)
    y = x1 + ff + ffb2_ref[...]                                       # residual 2

    y_ref[0] = y.astype(y_ref.dtype)


# --------------------------------------------------------------------------- #
# Kernel B: vocab projection, fully parallel (B, NV) grid, lane-dense tiles.
# --------------------------------------------------------------------------- #
def vocab_proj_kernel(y_ref, wp_ref, bp_ref, out_ref):
    logits = jnp.dot(y_ref[0], wp_ref[...],
                     preferred_element_type=jnp.float32) + bp_ref[...]
    out_ref[0] = logits.astype(out_ref.dtype)


def transformer_forward(x, params, *, n_heads, v_tile=512, out_dtype=jnp.float32):
    B, S, E = x.shape
    hd = E // n_heads
    H = params["ff_w1"].shape[1]
    V = params["proj_w"].shape[1]

    v_tile = min(v_tile, V)
    assert V % v_tile == 0, "pad vocab to a multiple of the vocab tile"
    NV = V // v_tile

    ffn_chunk = min(H, 512)
    if H % ffn_chunk != 0:
        ffn_chunk = H

    vmem_limit = _vmem_limit_bytes()

    def const_spec(shape):
        # weight whose block index never changes -> single-buffer it (Buffered(1))
        zeros = (0,) * len(shape)
        return _bspec(shape, lambda b, _z=zeros: _z, buffers=1)

    # ---- pallas_call A: transformer block, grid over batch ----
    y = pl.pallas_call(
        functools.partial(block_kernel, n_heads=n_heads, head_dim=hd,
                          ffn_chunk=ffn_chunk),
        out_shape=jax.ShapeDtypeStruct((B, S, E), jnp.bfloat16),
        grid_spec=pltpu.PrefetchScalarGridSpec(
            num_scalar_prefetch=0,
            grid=(B,),
            in_specs=[
                pl.BlockSpec((1, S, E), lambda b: (b, 0, 0)),         # x
                const_spec((1, E)), const_spec((1, E)),               # ln1 w, b
                const_spec((E, 3 * E)),                               # fused QKV (bf16, lane-dense)
                const_spec((1, E)), const_spec((1, E)),               # ln2 w, b
                const_spec((E, H)), const_spec((1, H)),               # ffn in  (bf16 W, f32 b)
                const_spec((H, E)), const_spec((1, E)),               # ffn out (bf16 W, f32 b)
            ],
            out_specs=pl.BlockSpec((1, S, E), lambda b: (b, 0, 0)),
        ),
        compiler_params=pltpu.CompilerParams(
            dimension_semantics=("parallel",),
            vmem_limit_bytes=vmem_limit),
    )(x,
      params["ln1_w"], params["ln1_b"],
      params["w_qkv"],
      params["ln2_w"], params["ln2_b"],
      params["ff_w1"], params["ff_b1"],
      params["ff_w2"], params["ff_b2"])

    # ---- pallas_call B: vocab projection, fully parallel grid ----
    proj_buffers = max(2, min(3, NV))
    logits = pl.pallas_call(
        vocab_proj_kernel,
        out_shape=jax.ShapeDtypeStruct((B, S, V), out_dtype),
        grid_spec=pltpu.PrefetchScalarGridSpec(
            num_scalar_prefetch=0,
            grid=(B, NV),
            in_specs=[
                pl.BlockSpec((1, S, E), lambda b, vv: (b, 0, 0)),     # y (bf16)
                _bspec((E, v_tile), lambda b, vv: (0, vv),
                       buffers=proj_buffers),                         # proj W tile (bf16, streamed)
                pl.BlockSpec((1, v_tile), lambda b, vv: (0, vv)),     # proj b tile
            ],
            out_specs=pl.BlockSpec((1, S, v_tile), lambda b, vv: (b, 0, vv)),
        ),
        compiler_params=pltpu.CompilerParams(
            dimension_semantics=("parallel", "parallel"),
            vmem_limit_bytes=vmem_limit),
    )(y, params["proj_w"], params["proj_b"])

    return logits


# --------------------------------------------------------------------------- #
# Pure-JAX reference mirroring the PyTorch forward (eval mode) with the same
# bf16-operand / f32-accumulate matmul precision as the kernels.
# --------------------------------------------------------------------------- #
def reference_forward(x, params, *, n_heads):
    B, S, E = x.shape
    nh = n_heads
    hd = E // nh
    f32, bf16 = jnp.float32, jnp.bfloat16
    scale = 1.0 / math.sqrt(hd)

    xf = x.astype(f32)
    h = _layer_norm(xf, params["ln1_w"], params["ln1_b"])
    qkv = jnp.einsum('bse,ef->bsf', h.astype(bf16), params["w_qkv"],
                     preferred_element_type=f32)
    q = (qkv[..., 0 * E:1 * E] * scale).reshape(B, S, nh, hd).transpose(0, 2, 1, 3)
    k = qkv[..., 1 * E:2 * E].reshape(B, S, nh, hd).transpose(0, 2, 1, 3)
    v = qkv[..., 2 * E:3 * E].reshape(B, S, nh, hd).transpose(0, 2, 1, 3)
    s = jnp.einsum('bhqd,bhkd->bhqk', q.astype(bf16), k.astype(bf16),
                   preferred_element_type=f32)
    mask = jnp.triu(jnp.ones((S, S), dtype=bool), k=1)
    s = jnp.where(mask[None, None], -1e30, s)
    p = jax.nn.softmax(s, axis=-1)
    ctx = jnp.einsum('bhqk,bhkd->bhqd', p.astype(bf16), v.astype(bf16),
                     preferred_element_type=f32)
    ctx = ctx.transpose(0, 2, 1, 3).reshape(B, S, E)
    x1 = xf + ctx
    h2 = _layer_norm(x1, params["ln2_w"], params["ln2_b"])
    h1 = jnp.einsum('bse,eh->bsh', h2.astype(bf16), params["ff_w1"],
                    preferred_element_type=f32) + params["ff_b1"]
    g = _gelu_tanh(h1)
    f = jnp.einsum('bsh,he->bse', g.astype(bf16), params["ff_w2"],
                   preferred_element_type=f32) + params["ff_b2"]
    y = (x1 + f).astype(bf16)                 # kernel hands y to the projection in bf16
    return jnp.einsum('bse,ev->bsv', y, params["proj_w"],
                      preferred_element_type=f32) + params["proj_b"]


def init_params(key, emb_dim, vocab_size, n_heads):
    E, V = emb_dim, vocab_size
    H = 4 * E
    ks = jax.random.split(key, 8)
    s_in = 1.0 / math.sqrt(E)
    s_h = 1.0 / math.sqrt(H)

    # nn.Linear convention: y = x @ W + b with W stored (in, out).
    # Scaled randn keeps the toy-shape softmax well-conditioned (test data only).
    W_q = jax.random.normal(ks[0], (E, E), jnp.float32) * s_in
    W_k = jax.random.normal(ks[1], (E, E), jnp.float32) * s_in
    W_v = jax.random.normal(ks[2], (E, E), jnp.float32) * s_in
    w_qkv = jnp.concatenate([W_q, W_k, W_v], axis=1)                  # (E, 3E) fused, lane-dense

    return {
        "ln1_w": jnp.ones((1, E), jnp.float32),
        "ln1_b": jnp.zeros((1, E), jnp.float32),
        "ln2_w": jnp.ones((1, E), jnp.float32),
        "ln2_b": jnp.zeros((1, E), jnp.float32),
        # bf16 MXU weights, f32 biases
        "w_qkv": w_qkv.astype(jnp.bfloat16),
        "ff_w1": (jax.random.normal(ks[3], (E, H), jnp.float32) * s_in).astype(jnp.bfloat16),
        "ff_b1": jax.random.normal(ks[4], (1, H), jnp.float32) * s_in,
        "ff_w2": (jax.random.normal(ks[5], (H, E), jnp.float32) * s_h).astype(jnp.bfloat16),
        "ff_b2": jax.random.normal(ks[6], (1, E), jnp.float32) * s_h,
        "proj_w": (jax.random.normal(ks[7], (E, V), jnp.float32) * s_in).astype(jnp.bfloat16),
        "proj_b": jax.random.normal(ks[0], (1, V), jnp.float32) * s_in,
    }


if __name__ == "__main__":
    # batch=2, seq=8, emb=32, heads=4; vocab=2048 so the projection exercises
    # four 512-wide lane-dense tiles with 3-deep weight buffering.
    B, S, E, NH, V = 2, 8, 32, 4, 2048
    key = jax.random.PRNGKey(0)
    k_x, k_p = jax.random.split(key)
    x = jax.random.normal(k_x, (B, S, E), jnp.float32)
    params = init_params(k_p, E, V, NH)

    out = jax.block_until_ready(transformer_forward(x, params, n_heads=NH))
    ref = reference_forward(x, params, n_heads=NH)

    assert out.shape == (B, S, V)
    max_err = float(jnp.max(jnp.abs(out - ref)))
    assert jnp.allclose(out, ref, rtol=2e-2, atol=5e-2), \
        f"mismatch vs reference (max abs err {max_err})"

    print("KERNEL_OK")
</pallas_src>

<mosaic_0001>
module attributes {stable_mosaic.version = 11 : i64} {
  func.func @block_kernel(%arg0: i32, %arg1: memref<1x8x32xf32, #tpu.memory_space<vmem>>, %arg2: memref<1x32xf32, #tpu.memory_space<vmem>>, %arg3: memref<1x32xf32, #tpu.memory_space<vmem>>, %arg4: memref<32x96xbf16, #tpu.memory_space<vmem>>, %arg5: memref<1x32xf32, #tpu.memory_space<vmem>>, %arg6: memref<1x32xf32, #tpu.memory_space<vmem>>, %arg7: memref<32x128xbf16, #tpu.memory_space<vmem>>, %arg8: memref<1x128xf32, #tpu.memory_space<vmem>>, %arg9: memref<128x32xbf16, #tpu.memory_space<vmem>>, %arg10: memref<1x32xf32, #tpu.memory_space<vmem>>, %arg11: memref<1x8x32xbf16, #tpu.memory_space<vmem>>) attributes {dimension_semantics = [#tpu.dimension_semantics<parallel>], iteration_bounds = array<i64: 2>, scalar_prefetch = 0 : i64, scratch_operands = 0 : i64, tpu.core_type = #tpu.core_type<tc>, window_params = [{transform_indices = @transform_0, window_bounds = array<i64: 1, 8, 32>}, {pipeline_mode = #tpu.pipeline_mode<synchronous>, transform_indices = @transform_1, window_bounds = array<i64: 1, 32>}, {pipeline_mode = #tpu.pipeline_mode<synchronous>, transform_indices = @transform_2, window_bounds = array<i64: 1, 32>}, {pipeline_mode = #tpu.pipeline_mode<synchronous>, transform_indices = @transform_3, window_bounds = array<i64: 32, 96>}, {pipeline_mode = #tpu.pipeline_mode<synchronous>, transform_indices = @transform_4, window_bounds = array<i64: 1, 32>}, {pipeline_mode = #tpu.pipeline_mode<synchronous>, transform_indices = @transform_5, window_bounds = array<i64: 1, 32>}, {pipeline_mode = #tpu.pipeline_mode<synchronous>, transform_indices = @transform_6, window_bounds = array<i64: 32, 128>}, {pipeline_mode = #tpu.pipeline_mode<synchronous>, transform_indices = @transform_7, window_bounds = array<i64: 1, 128>}, {pipeline_mode = #tpu.pipeline_mode<synchronous>, transform_indices = @transform_8, window_bounds = array<i64: 128, 32>}, {pipeline_mode = #tpu.pipeline_mode<synchronous>, transform_indices = @transform_9, window_bounds = array<i64: 1, 32>}, {transform_indices = @transform_10, window_bounds = array<i64: 1, 8, 32>}]} {
    %c0 = arith.constant 0 : index
    %c0_0 = arith.constant 0 : index
    %c0_1 = arith.constant 0 : index
    %0 = vector.load %arg1[%c0, %c0_0, %c0_1] : memref<1x8x32xf32, #tpu.memory_space<vmem>>, vector<1x8x32xf32>
    %1 = vector.shape_cast %0 : vector<1x8x32xf32> to vector<8x32xf32>
    %c0_2 = arith.constant 0 : index
    %c0_3 = arith.constant 0 : index
    %2 = vector.load %arg2[%c0_2, %c0_3] : memref<1x32xf32, #tpu.memory_space<vmem>>, vector<1x32xf32>
    %c0_4 = arith.constant 0 : index
    %c0_5 = arith.constant 0 : index
    %3 = vector.load %arg3[%c0_4, %c0_5] : memref<1x32xf32, #tpu.memory_space<vmem>>, vector<1x32xf32>
    %cst = arith.constant dense<0.000000e+00> : vector<8xf32>
    %4 = vector.multi_reduction <add>, %1, %cst [1] : vector<8x32xf32> to vector<8xf32>
    %5 = vector.shape_cast %4 : vector<8xf32> to vector<8x1xf32>
    %cst_6 = arith.constant 3.200000e+01 : f32
    %6 = vector.broadcast %cst_6 : f32 to vector<8x1xf32>
    %7 = arith.divf %5, %6 : vector<8x1xf32>
    %8 = vector.broadcast %7 : vector<8x1xf32> to vector<8x32xf32>
    %9 = arith.subf %1, %8 : vector<8x32xf32>
    %10 = arith.mulf %9, %9 : vector<8x32xf32>
    %cst_7 = arith.constant dense<0.000000e+00> : vector<8xf32>
    %11 = vector.multi_reduction <add>, %10, %cst_7 [1] : vector<8x32xf32> to vector<8xf32>
    %12 = vector.shape_cast %11 : vector<8xf32> to vector<8x1xf32>
    %cst_8 = arith.constant 3.200000e+01 : f32
    %13 = vector.broadcast %cst_8 : f32 to vector<8x1xf32>
    %14 = arith.divf %12, %13 : vector<8x1xf32>
    %15 = vector.broadcast %7 : vector<8x1xf32> to vector<8x32xf32>
    %16 = arith.subf %1, %15 : vector<8x32xf32>
    %cst_9 = arith.constant 9.99999974E-6 : f32
    %17 = vector.broadcast %cst_9 : f32 to vector<8x1xf32>
    %18 = arith.addf %14, %17 : vector<8x1xf32>
    %19 = math.rsqrt %18 : vector<8x1xf32>
    %20 = vector.broadcast %19 : vector<8x1xf32> to vector<8x32xf32>
    %21 = arith.mulf %16, %20 : vector<8x32xf32>
    %22 = vector.broadcast %2 : vector<1x32xf32> to vector<8x32xf32>
    %23 = arith.mulf %22, %21 : vector<8x32xf32>
    %24 = vector.broadcast %3 : vector<1x32xf32> to vector<8x32xf32>
    %25 = arith.addf %23, %24 : vector<8x32xf32>
    %26 = arith.truncf %25 : vector<8x32xf32> to vector<8x32xbf16>
    %c0_10 = arith.constant 0 : index
    %c0_11 = arith.constant 0 : index
    %27 = vector.load %arg4[%c0_10, %c0_11] : memref<32x96xbf16, #tpu.memory_space<vmem>>, vector<32x96xbf16>
    %cst_12 = arith.constant dense<0.000000e+00> : vector<8x96xf32>
    %28 = tpu.matmul %26, %27, %cst_12 {dimension_numbers = #tpu.dot_dimension_numbers<[1], [0], [0], [1], [0, 0, 1, 1], [], []>} : vector<8x32xbf16>, vector<32x96xbf16>, vector<8x96xf32> -> vector<8x96xf32>
    %29 = vector.extract_strided_slice %28 {offsets = [0, 0], sizes = [8, 32], strides = [1, 1]} : vector<8x96xf32> to vector<8x32xf32>
    %cst_13 = arith.constant 0.353553385 : f32
    %30 = vector.broadcast %cst_13 : f32 to vector<8x32xf32>
    %31 = arith.mulf %29, %30 : vector<8x32xf32>
    %32 = vector.shape_cast %31 : vector<8x32xf32> to vector<8x4x8xf32>
    %33 = vector.extract_strided_slice %28 {offsets = [0, 32], sizes = [8, 32], strides = [1, 1]} : vector<8x96xf32> to vector<8x32xf32>
    %34 = vector.shape_cast %33 : vector<8x32xf32> to vector<8x4x8xf32>
    %35 = vector.extract_strided_slice %28 {offsets = [0, 64], sizes = [8, 32], strides = [1, 1]} : vector<8x96xf32> to vector<8x32xf32>
    %36 = vector.shape_cast %35 : vector<8x32xf32> to vector<8x4x8xf32>
    %37 = tpu.transpose %32, [1, 0, 2] : vector<8x4x8xf32> -> vector<4x8x8xf32>
    %38 = arith.truncf %37 : vector<4x8x8xf32> to vector<4x8x8xbf16>
    %39 = tpu.transpose %34, [1, 0, 2] : vector<8x4x8xf32> -> vector<4x8x8xf32>
    %40 = arith.truncf %39 : vector<4x8x8xf32> to vector<4x8x8xbf16>
    %41 = tpu.transpose %36, [1, 0, 2] : vector<8x4x8xf32> -> vector<4x8x8xf32>
    %42 = arith.truncf %41 : vector<4x8x8xf32> to vector<4x8x8xbf16>
    "tpu.trace_start"() <{level = 10 : i32, message = "hqd,hkd->hqk"}> : () -> ()
    %cst_14 = arith.constant dense<0.000000e+00> : vector<4x8x8xf32>
    %43 = tpu.matmul %38, %40, %cst_14 {dimension_numbers = #tpu.dot_dimension_numbers<[2], [2], [1], [1], [0, 0, 0, 1, 1, 1], [0], [0]>} : vector<4x8x8xbf16>, vector<4x8x8xbf16>, vector<4x8x8xf32> -> vector<4x8x8xf32>
    "tpu.trace_stop"() : () -> ()
    %44 = tpu.iota {dimensions = array<i32: 0>} : vector<8x8xi32>
    %45 = tpu.iota {dimensions = array<i32: 1>} : vector<8x8xi32>
    %46 = arith.cmpi sle, %45, %44 : vector<8x8xi32>
    %47 = vector.shape_cast %46 : vector<8x8xi1> to vector<1x8x8xi1>
    %cst_15 = arith.constant -1.000000e+30 : f32
    %48 = vector.shape_cast %47 : vector<1x8x8xi1> to vector<1x8x8xi1>
    %49 = vector.broadcast %48 : vector<1x8x8xi1> to vector<4x8x8xi1>
    %50 = vector.broadcast %cst_15 : f32 to vector<4x8x8xf32>
    %51 = arith.select %49, %43, %50 : vector<4x8x8xi1>, vector<4x8x8xf32>
    %cst_16 = arith.constant dense<0xFF800000> : vector<4x8xf32>
    %52 = vector.multi_reduction <maximumf>, %51, %cst_16 [2] : vector<4x8x8xf32> to vector<4x8xf32>
    %53 = vector.shape_cast %52 : vector<4x8xf32> to vector<4x8x1xf32>
    %54 = vector.broadcast %53 : vector<4x8x1xf32> to vector<4x8x8xf32>
    %55 = arith.subf %51, %54 : vector<4x8x8xf32>
    %56 = math.exp %55 : vector<4x8x8xf32>
    %cst_17 = arith.constant dense<0.000000e+00> : vector<4x8xf32>
    %57 = vector.multi_reduction <add>, %56, %cst_17 [2] : vector<4x8x8xf32> to vector<4x8xf32>
    %58 = vector.shape_cast %57 : vector<4x8xf32> to vector<4x8x1xf32>
    %59 = tpu.reciprocal %58 {approx = true} : vector<4x8x1xf32> -> vector<4x8x1xf32>
    %60 = vector.broadcast %59 : vector<4x8x1xf32> to vector<4x8x8xf32>
    %61 = arith.mulf %56, %60 : vector<4x8x8xf32>
    %62 = arith.truncf %61 : vector<4x8x8xf32> to vector<4x8x8xbf16>
    "tpu.trace_start"() <{level = 10 : i32, message = "hqk,hkd->hqd"}> : () -> ()
    %cst_18 = arith.constant dense<0.000000e+00> : vector<4x8x8xf32>
    %63 = tpu.matmul %62, %42, %cst_18 {dimension_numbers = #tpu.dot_dimension_numbers<[2], [1], [1], [2], [0, 0, 0, 1, 1, 2], [0], [0]>} : vector<4x8x8xbf16>, vector<4x8x8xbf16>, vector<4x8x8xf32> -> vector<4x8x8xf32>
    "tpu.trace_stop"() : () -> ()
    %64 = tpu.transpose %63, [1, 0, 2] : vector<4x8x8xf32> -> vector<8x4x8xf32>
    %65 = vector.shape_cast %64 : vector<8x4x8xf32> to vector<8x32xf32>
    %66 = arith.addf %1, %65 : vector<8x32xf32>
    %c0_19 = arith.constant 0 : index
    %c0_20 = arith.constant 0 : index
    %67 = vector.load %arg5[%c0_19, %c0_20] : memref<1x32xf32, #tpu.memory_space<vmem>>, vector<1x32xf32>
    %c0_21 = arith.constant 0 : index
    %c0_22 = arith.constant 0 : index
    %68 = vector.load %arg6[%c0_21, %c0_22] : memref<1x32xf32, #tpu.memory_space<vmem>>, vector<1x32xf32>
    %cst_23 = arith.constant dense<0.000000e+00> : vector<8xf32>
    %69 = vector.multi_reduction <add>, %66, %cst_23 [1] : vector<8x32xf32> to vector<8xf32>
    %70 = vector.shape_cast %69 : vector<8xf32> to vector<8x1xf32>
    %cst_24 = arith.constant 3.200000e+01 : f32
    %71 = vector.broadcast %cst_24 : f32 to vector<8x1xf32>
    %72 = arith.divf %70, %71 : vector<8x1xf32>
    %73 = vector.broadcast %72 : vector<8x1xf32> to vector<8x32xf32>
    %74 = arith.subf %66, %73 : vector<8x32xf32>
    %75 = arith.mulf %74, %74 : vector<8x32xf32>
    %cst_25 = arith.constant dense<0.000000e+00> : vector<8xf32>
    %76 = vector.multi_reduction <add>, %75, %cst_25 [1] : vector<8x32xf32> to vector<8xf32>
    %77 = vector.shape_cast %76 : vector<8xf32> to vector<8x1xf32>
    %cst_26 = arith.constant 3.200000e+01 : f32
    %78 = vector.broadcast %cst_26 : f32 to vector<8x1xf32>
    %79 = arith.divf %77, %78 : vector<8x1xf32>
    %80 = vector.broadcast %72 : vector<8x1xf32> to vector<8x32xf32>
    %81 = arith.subf %66, %80 : vector<8x32xf32>
    %cst_27 = arith.constant 9.99999974E-6 : f32
    %82 = vector.broadcast %cst_27 : f32 to vector<8x1xf32>
    %83 = arith.addf %79, %82 : vector<8x1xf32>
    %84 = math.rsqrt %83 : vector<8x1xf32>
    %85 = vector.broadcast %84 : vector<8x1xf32> to vector<8x32xf32>
    %86 = arith.mulf %81, %85 : vector<8x32xf32>
    %87 = vector.broadcast %67 : vector<1x32xf32> to vector<8x32xf32>
    %88 = arith.mulf %87, %86 : vector<8x32xf32>
    %89 = vector.broadcast %68 : vector<1x32xf32> to vector<8x32xf32>
    %90 = arith.addf %88, %89 : vector<8x32xf32>
    %91 = arith.truncf %90 : vector<8x32xf32> to vector<8x32xbf16>
    %cst_28 = arith.constant 0.000000e+00 : f32
    %92 = vector.broadcast %cst_28 : f32 to vector<8x32xf32>
    %c0_i32 = arith.constant 0 : i32
    %c128_i32 = arith.constant 128 : i32
    %93 = arith.muli %c0_i32, %c128_i32 : i32
    %94 = tpu.assume_multiple %93, 128 : i32
    %c0_29 = arith.constant 0 : index
    %95 = arith.index_cast %94 : i32 to index
    %96 = vector.load %arg7[%c0_29, %95] : memref<32x128xbf16, #tpu.memory_space<vmem>>, vector<32x128xbf16>
    %cst_30 = arith.constant dense<0.000000e+00> : vector<8x128xf32>
    %97 = tpu.matmul %91, %96, %cst_30 {dimension_numbers = #tpu.dot_dimension_numbers<[1], [0], [0], [1], [0, 0, 1, 1], [], []>} : vector<8x32xbf16>, vector<32x128xbf16>, vector<8x128xf32> -> vector<8x128xf32>
    %c0_31 = arith.constant 0 : index
    %98 = arith.index_cast %94 : i32 to index
    %99 = vector.load %arg8[%c0_31, %98] : memref<1x128xf32, #tpu.memory_space<vmem>>, vector<1x128xf32>
    %100 = vector.broadcast %99 : vector<1x128xf32> to vector<8x128xf32>
    %101 = arith.addf %97, %100 : vector<8x128xf32>
    %cst_32 = arith.constant 5.000000e-01 : f32
    %102 = vector.broadcast %cst_32 : f32 to vector<8x128xf32>
    %103 = arith.mulf %102, %101 : vector<8x128xf32>
    %cst_33 = arith.constant 0.636619746 : f32
    %104 = math.sqrt %cst_33 : f32
    %cst_34 = arith.constant 4.471500e-02 : f32
    %105 = vector.broadcast %cst_34 : f32 to vector<8x128xf32>
    %106 = arith.mulf %105, %101 : vector<8x128xf32>
    %107 = arith.mulf %106, %101 : vector<8x128xf32>
    %108 = arith.mulf %107, %101 : vector<8x128xf32>
    %109 = arith.addf %101, %108 : vector<8x128xf32>
    %110 = vector.broadcast %104 : f32 to vector<8x128xf32>
    %111 = arith.mulf %110, %109 : vector<8x128xf32>
    %112 = math.tanh %111 : vector<8x128xf32>
    %cst_35 = arith.constant 1.000000e+00 : f32
    %113 = vector.broadcast %cst_35 : f32 to vector<8x128xf32>
    %114 = arith.addf %113, %112 : vector<8x128xf32>
    %115 = arith.mulf %103, %114 : vector<8x128xf32>
    %116 = arith.truncf %115 : vector<8x128xf32> to vector<8x128xbf16>
    %117 = arith.index_cast %94 : i32 to index
    %c0_36 = arith.constant 0 : index
    %118 = vector.load %arg9[%117, %c0_36] : memref<128x32xbf16, #tpu.memory_space<vmem>>, vector<128x32xbf16>
    %cst_37 = arith.constant dense<0.000000e+00> : vector<8x32xf32>
    %119 = tpu.matmul %116, %118, %cst_37 {dimension_numbers = #tpu.dot_dimension_numbers<[1], [0], [0], [1], [0, 0, 1, 1], [], []>} : vector<8x128xbf16>, vector<128x32xbf16>, vector<8x32xf32> -> vector<8x32xf32>
    %120 = arith.addf %92, %119 : vector<8x32xf32>
    %c1_i32 = arith.constant 1 : i32
    %121 = arith.addf %66, %120 : vector<8x32xf32>
    %c0_38 = arith.constant 0 : index
    %c0_39 = arith.constant 0 : index
    %122 = vector.load %arg10[%c0_38, %c0_39] : memref<1x32xf32, #tpu.memory_space<vmem>>, vector<1x32xf32>
    %123 = vector.broadcast %122 : vector<1x32xf32> to vector<8x32xf32>
    %124 = arith.addf %121, %123 : vector<8x32xf32>
    %125 = arith.truncf %124 : vector<8x32xf32> to vector<8x32xbf16>
    %c0_40 = arith.constant 0 : index
    %c0_41 = arith.constant 0 : index
    %c0_42 = arith.constant 0 : index
    %126 = vector.load %arg11[%c0_40, %c0_41, %c0_42] : memref<1x8x32xbf16, #tpu.memory_space<vmem>>, vector<1x8x32xbf16>
    %127 = vector.shape_cast %126 : vector<1x8x32xbf16> to vector<8x32xbf16>
    %128 = vector.shape_cast %125 : vector<8x32xbf16> to vector<1x8x32xbf16>
    tpu.vector_store %arg11[%c0_40, %c0_41, %c0_42], %128 {strides = array<i32>} : memref<1x8x32xbf16, #tpu.memory_space<vmem>>, vector<1x8x32xbf16>,
    return
  }
  func.func @transform_0(%arg0: i32) -> (i32, i32, i32) {
    %c0_i32 = arith.constant 0 : i32
    %c0_i32_0 = arith.constant 0 : i32
    %c0_i32_1 = arith.constant 0 : i32
    return %arg0, %c0_i32, %c0_i32_0 : i32, i32, i32
  }
  func.func @transform_1(%arg0: i32) -> (i32, i32) {
    %c0_i32 = arith.constant 0 : i32
    %c0_i32_0 = arith.constant 0 : i32
    %c0_i32_1 = arith.constant 0 : i32
    return %c0_i32, %c0_i32_0 : i32, i32
  }
  func.func @transform_2(%arg0: i32) -> (i32, i32) {
    %c0_i32 = arith.constant 0 : i32
    %c0_i32_0 = arith.constant 0 : i32
    %c0_i32_1 = arith.constant 0 : i32
    return %c0_i32, %c0_i32_0 : i32, i32
  }
  func.func @transform_3(%arg0: i32) -> (i32, i32) {
    %c0_i32 = arith.constant 0 : i32
    %c0_i32_0 = arith.constant 0 : i32
    %c0_i32_1 = arith.constant 0 : i32
    return %c0_i32, %c0_i32_0 : i32, i32
  }
  func.func @transform_4(%arg0: i32) -> (i32, i32) {
    %c0_i32 = arith.constant 0 : i32
    %c0_i32_0 = arith.constant 0 : i32
    %c0_i32_1 = arith.constant 0 : i32
    return %c0_i32, %c0_i32_0 : i32, i32
  }
  func.func @transform_5(%arg0: i32) -> (i32, i32) {
    %c0_i32 = arith.constant 0 : i32
    %c0_i32_0 = arith.constant 0 : i32
    %c0_i32_1 = arith.constant 0 : i32
    return %c0_i32, %c0_i32_0 : i32, i32
  }
  func.func @transform_6(%arg0: i32) -> (i32, i32) {
    %c0_i32 = arith.constant 0 : i32
    %c0_i32_0 = arith.constant 0 : i32
    %c0_i32_1 = arith.constant 0 : i32
    return %c0_i32, %c0_i32_0 : i32, i32
  }
  func.func @transform_7(%arg0: i32) -> (i32, i32) {
    %c0_i32 = arith.constant 0 : i32
    %c0_i32_0 = arith.constant 0 : i32
    %c0_i32_1 = arith.constant 0 : i32
    return %c0_i32, %c0_i32_0 : i32, i32
  }
  func.func @transform_8(%arg0: i32) -> (i32, i32) {
    %c0_i32 = arith.constant 0 : i32
    %c0_i32_0 = arith.constant 0 : i32
    %c0_i32_1 = arith.constant 0 : i32
    return %c0_i32, %c0_i32_0 : i32, i32
  }
  func.func @transform_9(%arg0: i32) -> (i32, i32) {
    %c0_i32 = arith.constant 0 : i32
    %c0_i32_0 = arith.constant 0 : i32
    %c0_i32_1 = arith.constant 0 : i32
    return %c0_i32, %c0_i32_0 : i32, i32
  }
  func.func @transform_10(%arg0: i32) -> (i32, i32, i32) {
    %c0_i32 = arith.constant 0 : i32
    %c0_i32_0 = arith.constant 0 : i32
    %c0_i32_1 = arith.constant 0 : i32
    return %arg0, %c0_i32, %c0_i32_0 : i32, i32, i32
  }
}

</mosaic_0001>

<llo_original>
// kernel: tpu_custom_call.1
$region0: #{tpu_custom_call.1}
  #allocation0 [shape = 'u32[]', space=smem, size = 0x4, offset = 0x4, fixed_abs, tag = 'smem constant byte address 0x4 - core index']
  #allocation1 [shape = 'u32[144,128]{1,0:T(1,128)}', space=vmem, size = 0x12000, scoped, tag = 'internal scratch']
  %s0 = inlined_call_operand.vmem [shape: f32[2,8,32], index: 0, kind: input, shape index: {}]
  %s1 = inlined_call_operand.vmem [shape: f32[1,32], index: 1, kind: input, shape index: {}]
  %s2 = inlined_call_operand.vmem [shape: f32[1,32], index: 2, kind: input, shape index: {}]
  %s3 = inlined_call_operand.vmem [shape: bf16[32,96], index: 3, kind: input, shape index: {}]
  %s4 = inlined_call_operand.vmem [shape: f32[1,32], index: 4, kind: input, shape index: {}]
  %s5 = inlined_call_operand.vmem [shape: f32[1,32], index: 5, kind: input, shape index: {}]
  %s6 = inlined_call_operand.vmem [shape: bf16[32,128], index: 6, kind: input, shape index: {}]
  %s7 = inlined_call_operand.vmem [shape: f32[1,128], index: 7, kind: input, shape index: {}]
  %s8 = inlined_call_operand.vmem [shape: bf16[128,32], index: 8, kind: input, shape index: {}]
  %s9 = inlined_call_operand.vmem [shape: f32[1,32], index: 9, kind: input, shape index: {}]
  %s10 = inlined_call_operand.hbm [shape: bf16[2,8,32], index: 10, kind: output, shape index: {}]
  %s11 = sld [smem:[#allocation0]]
  $region73: #{tpu_custom_call.1} parent=0
    _
  %s13 = ssub.s32 1, %s11
  %s14 = scalar_select 0, %s13, %s11
  $region1: #{tpu_custom_call.1} parent=0
    #allocation2 [shape = 'u8[4096]{0}', space=vmem, size = 0x1000, scoped, tag = 'output window, operand 0']
    #allocation3 [shape = 's32[2]{0}', space=sflag, size = 0x8, scoped, tag = 'scoped memory for tpu_custom_call.1']
    %15 = vsyncpa [#allocation3], 0
    %s16 = scalar_lea.sflag [#allocation3], 1
    %17 = vsyncpa %s16, 0
    loop: start=0, step=1, limit=4
    $region2: #{tpu_custom_call.1} parent=1 // loop_pre_header
      _
    $region3: #{tpu_custom_call.1} parent=1 // loop_header
      %s19 = sphi 0, %s23
      %p20 = scmp.ge.s32.totalorder %s19, 4
      %s29 = sphi 0, %s31
      %s32 = sphi 0, %s29
      %s33 = sphi 0, %s32
      %s49 = sphi 0, %s33
      %s53 = sphi 0, %s53
      %s55 = sphi 0, %s53
      %s56 = sphi 0, %s55
      %s70 = sphi 0, %s56
      %s74 = sphi 0, %s74
      %s76 = sphi 0, %s74
      %s77 = sphi 0, %s76
      %s91 = sphi 0, %s77
      %s95 = sphi 0, %s95
      %s97 = sphi 0, %s95
      %s98 = sphi 0, %s97
      %s112 = sphi 0, %s98
      %s116 = sphi 0, %s116
      %s118 = sphi 0, %s116
      %s119 = sphi 0, %s118
      %s133 = sphi 0, %s119
      %s137 = sphi 0, %s137
      %s139 = sphi 0, %s137
      %s140 = sphi 0, %s139
      %s154 = sphi 0, %s140
      %s158 = sphi 0, %s158
      %s160 = sphi 0, %s158
      %s161 = sphi 0, %s160
      %s175 = sphi 0, %s161
      %s179 = sphi 0, %s179
      %s181 = sphi 0, %s179
      %s182 = sphi 0, %s181
      %s196 = sphi 0, %s182
      %s200 = sphi 0, %s200
      %s202 = sphi 0, %s200
      %s203 = sphi 0, %s202
      %s217 = sphi 0, %s203
      %s221 = sphi 0, %s221
      %s223 = sphi 0, %s221
      %s224 = sphi 0, %s223
      %s238 = sphi 0, %s224
      %s244 = sphi 0, %s246
      %s247 = sphi 0, %s244
      %s248 = sphi 0, %s247
      %s264 = sphi 0, %s248
    $region4: #{tpu_custom_call.1} parent=1 // loop_header_branch
      %22 = sbr.rel (%p20) target = $region8
    $region5: #{tpu_custom_call.1} parent=1 // loop_body
      %s24 = ssub.s32 %s19, 1
      %s25 = ssub.s32 %s19, 2
      %s26 = sadd.s32 %s19, 1
      %s27 = ssub.s32 %s19, %s26
      %p28 = scmp.eq.s32.totalorder %s27, 0
      %s30 = sadd.s32 %s29, 1
      %s31 = scalar_select %p28, %s29, %s30
      %p34 = pneg %p28
      %p35 = scmp.eq.s32.totalorder %s19, 1
      %p36 = por %p34, %p35
      %p37 = scmp.ne.s32.totalorder %s29, %s32
      %p38 = scmp.eq.s32.totalorder %s19, 0
      %p39 = por %p37, %p38
      %p40 = scmp.ne.s32.totalorder %s29, %s32
      %p41 = scmp.eq.s32.totalorder %s24, 1
      %p42 = por %p40, %p41
      %p43 = scmp.ne.s32.totalorder %s32, %s33
      %p44 = scmp.eq.s32.totalorder %s24, 0
      %p45 = por %p43, %p44
      %p46 = scmp.ne.s32.totalorder %s32, %s33
      %p47 = scmp.eq.s32.totalorder %s25, 1
      %p48 = por %p46, %p47
      %p50 = scmp.ne.s32.totalorder %s33, %s49
      %p51 = scmp.eq.s32.totalorder %s25, 0
      %p52 = por %p50, %p51
      %s54 = sadd.s32 %s53, 1
      %p57 = scmp.eq.s32.totalorder %s19, 1
      %p58 = scmp.ne.s32.totalorder %s53, %s55
      %p59 = scmp.eq.s32.totalorder %s19, 0
      %p60 = por %p58, %p59
      %p61 = scmp.ne.s32.totalorder %s53, %s55
      %p62 = scmp.eq.s32.totalorder %s24, 1
      %p63 = por %p61, %p62
      %p64 = scmp.ne.s32.totalorder %s55, %s56
      %p65 = scmp.eq.s32.totalorder %s24, 0
      %p66 = por %p64, %p65
      %p67 = scmp.ne.s32.totalorder %s55, %s56
      %p68 = scmp.eq.s32.totalorder %s25, 1
      %p69 = por %p67, %p68
      %p71 = scmp.ne.s32.totalorder %s56, %s70
      %p72 = scmp.eq.s32.totalorder %s25, 0
      %p73 = por %p71, %p72
      %s75 = sadd.s32 %s74, 1
      %p78 = scmp.eq.s32.totalorder %s19, 1
      %p79 = scmp.ne.s32.totalorder %s74, %s76
      %p80 = scmp.eq.s32.totalorder %s19, 0
      %p81 = por %p79, %p80
      %p82 = scmp.ne.s32.totalorder %s74, %s76
      %p83 = scmp.eq.s32.totalorder %s24, 1
      %p84 = por %p82, %p83
      %p85 = scmp.ne.s32.totalorder %s76, %s77
      %p86 = scmp.eq.s32.totalorder %s24, 0
      %p87 = por %p85, %p86
      %p88 = scmp.ne.s32.totalorder %s76, %s77
      %p89 = scmp.eq.s32.totalorder %s25, 1
      %p90 = por %p88, %p89
      %p92 = scmp.ne.s32.totalorder %s77, %s91
      %p93 = scmp.eq.s32.totalorder %s25, 0
      %p94 = por %p92, %p93
      %s96 = sadd.s32 %s95, 1
      %p99 = scmp.eq.s32.totalorder %s19, 1
      %p100 = scmp.ne.s32.totalorder %s95, %s97
      %p101 = scmp.eq.s32.totalorder %s19, 0
      %p102 = por %p100, %p101
      %p103 = scmp.ne.s32.totalorder %s95, %s97
      %p104 = scmp.eq.s32.totalorder %s24, 1
      %p105 = por %p103, %p104
      %p106 = scmp.ne.s32.totalorder %s97, %s98
      %p107 = scmp.eq.s32.totalorder %s24, 0
      %p108 = por %p106, %p107
      %p109 = scmp.ne.s32.totalorder %s97, %s98
      %p110 = scmp.eq.s32.totalorder %s25, 1
      %p111 = por %p109, %p110
      %p113 = scmp.ne.s32.totalorder %s98, %s112
      %p114 = scmp.eq.s32.totalorder %s25, 0
      %p115 = por %p113, %p114
      %s117 = sadd.s32 %s116, 1
      %p120 = scmp.eq.s32.totalorder %s19, 1
      %p121 = scmp.ne.s32.totalorder %s116, %s118
      %p122 = scmp.eq.s32.totalorder %s19, 0
      %p123 = por %p121, %p122
      %p124 = scmp.ne.s32.totalorder %s116, %s118
      %p125 = scmp.eq.s32.totalorder %s24, 1
      %p126 = por %p124, %p125
      %p127 = scmp.ne.s32.totalorder %s118, %s119
      %p128 = scmp.eq.s32.totalorder %s24, 0
      %p129 = por %p127, %p128
      %p130 = scmp.ne.s32.totalorder %s118, %s119
      %p131 = scmp.eq.s32.totalorder %s25, 1
      %p132 = por %p130, %p131
      %p134 = scmp.ne.s32.totalorder %s119, %s133
      %p135 = scmp.eq.s32.totalorder %s25, 0
      %p136 = por %p134, %p135
      %s138 = sadd.s32 %s137, 1
      %p141 = scmp.eq.s32.totalorder %s19, 1
      %p142 = scmp.ne.s32.totalorder %s137, %s139
      %p143 = scmp.eq.s32.totalorder %s19, 0
      %p144 = por %p142, %p143
      %p145 = scmp.ne.s32.totalorder %s137, %s139
      %p146 = scmp.eq.s32.totalorder %s24, 1
      %p147 = por %p145, %p146
      %p148 = scmp.ne.s32.totalorder %s139, %s140
      %p149 = scmp.eq.s32.totalorder %s24, 0
      %p150 = por %p148, %p149
      %p151 = scmp.ne.s32.totalorder %s139, %s140
      %p152 = scmp.eq.s32.totalorder %s25, 1
      %p153 = por %p151, %p152
      %p155 = scmp.ne.s32.totalorder %s140, %s154
      %p156 = scmp.eq.s32.totalorder %s25, 0
      %p157 = por %p155, %p156
      %s159 = sadd.s32 %s158, 1
      %p162 = scmp.eq.s32.totalorder %s19, 1
      %p163 = scmp.ne.s32.totalorder %s158, %s160
      %p164 = scmp.eq.s32.totalorder %s19, 0
      %p165 = por %p163, %p164
      %p166 = scmp.ne.s32.totalorder %s158, %s160
      %p167 = scmp.eq.s32.totalorder %s24, 1
      %p168 = por %p166, %p167
      %p169 = scmp.ne.s32.totalorder %s160, %s161
      %p170 = scmp.eq.s32.totalorder %s24, 0
      %p171 = por %p169, %p170
      %p172 = scmp.ne.s32.totalorder %s160, %s161
      %p173 = scmp.eq.s32.totalorder %s25, 1
      %p174 = por %p172, %p173
      %p176 = scmp.ne.s32.totalorder %s161, %s175
      %p177 = scmp.eq.s32.totalorder %s25, 0
      %p178 = por %p176, %p177
      %s180 = sadd.s32 %s179, 1
      %p183 = scmp.eq.s32.totalorder %s19, 1
      %p184 = scmp.ne.s32.totalorder %s179, %s181
      %p185 = scmp.eq.s32.totalorder %s19, 0
      %p186 = por %p184, %p185
      %p187 = scmp.ne.s32.totalorder %s179, %s181
      %p188 = scmp.eq.s32.totalorder %s24, 1
      %p189 = por %p187, %p188
      %p190 = scmp.ne.s32.totalorder %s181, %s182
      %p191 = scmp.eq.s32.totalorder %s24, 0
      %p192 = por %p190, %p191
      %p193 = scmp.ne.s32.totalorder %s181, %s182
      %p194 = scmp.eq.s32.totalorder %s25, 1
      %p195 = por %p193, %p194
      %p197 = scmp.ne.s32.totalorder %s182, %s196
      %p198 = scmp.eq.s32.totalorder %s25, 0
      %p199 = por %p197, %p198
      %s201 = sadd.s32 %s200, 1
      %p204 = scmp.eq.s32.totalorder %s19, 1
      %p205 = scmp.ne.s32.totalorder %s200, %s202
      %p206 = scmp.eq.s32.totalorder %s19, 0
      %p207 = por %p205, %p206
      %p208 = scmp.ne.s32.totalorder %s200, %s202
      %p209 = scmp.eq.s32.totalorder %s24, 1
      %p210 = por %p208, %p209
      %p211 = scmp.ne.s32.totalorder %s202, %s203
      %p212 = scmp.eq.s32.totalorder %s24, 0
      %p213 = por %p211, %p212
      %p214 = scmp.ne.s32.totalorder %s202, %s203
      %p215 = scmp.eq.s32.totalorder %s25, 1
      %p216 = por %p214, %p215
      %p218 = scmp.ne.s32.totalorder %s203, %s217
      %p219 = scmp.eq.s32.totalorder %s25, 0
      %p220 = por %p218, %p219
      %s222 = sadd.s32 %s221, 1
      %p225 = scmp.eq.s32.totalorder %s19, 1
      %p226 = scmp.ne.s32.totalorder %s221, %s223
      %p227 = scmp.eq.s32.totalorder %s19, 0
      %p228 = por %p226, %p227
      %p229 = scmp.ne.s32.totalorder %s221, %s223
      %p230 = scmp.eq.s32.totalorder %s24, 1
      %p231 = por %p229, %p230
      %p232 = scmp.ne.s32.totalorder %s223, %s224
      %p233 = scmp.eq.s32.totalorder %s24, 0
      %p234 = por %p232, %p233
      %p235 = scmp.ne.s32.totalorder %s223, %s224
      %p236 = scmp.eq.s32.totalorder %s25, 1
      %p237 = por %p235, %p236
      %p239 = scmp.ne.s32.totalorder %s224, %s238
      %p240 = scmp.eq.s32.totalorder %s25, 0
      %p241 = por %p239, %p240
      %s242 = ssub.s32 %s19, %s26
      %p243 = scmp.eq.s32.totalorder %s242, 0
      %s245 = sadd.s32 %s244, 1
      %s246 = scalar_select %p243, %s244, %s245
      %p249 = pneg %p243
      %p250 = scmp.eq.s32.totalorder %s19, 1
      %p251 = por %p249, %p250
      %p252 = scmp.ne.s32.totalorder %s244, %s247
      %p253 = scmp.eq.s32.totalorder %s19, 0
      %p254 = por %p252, %p253
      %p255 = scmp.ne.s32.totalorder %s244, %s247
      %p256 = scmp.eq.s32.totalorder %s24, 1
      %p257 = por %p255, %p256
      %p258 = scmp.ne.s32.totalorder %s247, %s248
      %p259 = scmp.eq.s32.totalorder %s24, 0
      %p260 = por %p258, %p259
      %p261 = scmp.ne.s32.totalorder %s247, %s248
      %p262 = scmp.eq.s32.totalorder %s25, 1
      %p263 = por %p261, %p262
      %p265 = scmp.ne.s32.totalorder %s248, %s264
      %p266 = scmp.eq.s32.totalorder %s25, 0
      %p267 = por %p265, %p266
      %p268 = scmp.le.s32.totalorder 1, %s19
      %p269 = scmp.lt.s32.totalorder %s19, 3
      %p270 = pnand %p268, %p269
      %p271 = pneg %p270
      // Predicated region
      $region9: #{tpu_custom_call.1} parent=5 // pred_check
        _
      $region10: #{tpu_custom_call.1} parent=5 // pred_check_branch
        %273 = sbr.rel (%p270) target = $region12
      $region11: #{tpu_custom_call.1} parent=5 // pred_region
        %s274 = ssub.s32 %s19, 1
        // Predicated region
        $region13: #{tpu_custom_call.1} parent=11 // pred_check
          %p275 = pneg %p66
        $region14: #{tpu_custom_call.1} parent=11 // pred_check_branch
          %277 = sbr.rel (%p275) target = $region16
        $region15: #{tpu_custom_call.1} parent=11 // pred_region
          _
        $region16: #{tpu_custom_call.1} parent=11 // pred_fallthru
          _
        // Predicated region
        $region17: #{tpu_custom_call.1} parent=11 // pred_check
          %p278 = pneg %p87
        $region18: #{tpu_custom_call.1} parent=11 // pred_check_branch
          %280 = sbr.rel (%p278) target = $region20
        $region19: #{tpu_custom_call.1} parent=11 // pred_region
          _
        $region20: #{tpu_custom_call.1} parent=11 // pred_fallthru
          _
        // Predicated region
        $region21: #{tpu_custom_call.1} parent=11 // pred_check
          %p281 = pneg %p108
        $region22: #{tpu_custom_call.1} parent=11 // pred_check_branch
          %283 = sbr.rel (%p281) target = $region24
        $region23: #{tpu_custom_call.1} parent=11 // pred_region
          _
        $region24: #{tpu_custom_call.1} parent=11 // pred_fallthru
          _
        // Predicated region
        $region25: #{tpu_custom_call.1} parent=11 // pred_check
          %p284 = pneg %p129
        $region26: #{tpu_custom_call.1} parent=11 // pred_check_branch
          %286 = sbr.rel (%p284) target = $region28
        $region27: #{tpu_custom_call.1} parent=11 // pred_region
          _
        $region28: #{tpu_custom_call.1} parent=11 // pred_fallthru
          _
        // Predicated region
        $region29: #{tpu_custom_call.1} parent=11 // pred_check
          %p287 = pneg %p150
        $region30: #{tpu_custom_call.1} parent=11 // pred_check_branch
          %289 = sbr.rel (%p287) target = $region32
        $region31: #{tpu_custom_call.1} parent=11 // pred_region
          _
        $region32: #{tpu_custom_call.1} parent=11 // pred_fallthru
          _
        // Predicated region
        $region33: #{tpu_custom_call.1} parent=11 // pred_check
          %p290 = pneg %p171
        $region34: #{tpu_custom_call.1} parent=11 // pred_check_branch
          %292 = sbr.rel (%p290) target = $region36
        $region35: #{tpu_custom_call.1} parent=11 // pred_region
          _
        $region36: #{tpu_custom_call.1} parent=11 // pred_fallthru
          _
        // Predicated region
        $region37: #{tpu_custom_call.1} parent=11 // pred_check
          %p293 = pneg %p192
        $region38: #{tpu_custom_call.1} parent=11 // pred_check_branch
          %295 = sbr.rel (%p293) target = $region40
        $region39: #{tpu_custom_call.1} parent=11 // pred_region
          _
        $region40: #{tpu_custom_call.1} parent=11 // pred_fallthru
          _
        // Predicated region
        $region41: #{tpu_custom_call.1} parent=11 // pred_check
          %p296 = pneg %p213
        $region42: #{tpu_custom_call.1} parent=11 // pred_check_branch
          %298 = sbr.rel (%p296) target = $region44
        $region43: #{tpu_custom_call.1} parent=11 // pred_region
          _
        $region44: #{tpu_custom_call.1} parent=11 // pred_fallthru
          _
        // Predicated region
        $region45: #{tpu_custom_call.1} parent=11 // pred_check
          %p299 = pneg %p234
        $region46: #{tpu_custom_call.1} parent=11 // pred_check_branch
          %301 = sbr.rel (%p299) target = $region48
        $region47: #{tpu_custom_call.1} parent=11 // pred_region
          _
        $region48: #{tpu_custom_call.1} parent=11 // pred_fallthru
          _
      $region12: #{tpu_custom_call.1} parent=5 // pred_fallthru
        _
      %p302 = scmp.lt.s32.totalorder %s19, 2
      // Predicated region
      $region49: #{tpu_custom_call.1} parent=5 // pred_check
        %p303 = pneg %p302
      $region50: #{tpu_custom_call.1} parent=5 // pred_check_branch
        %305 = sbr.rel (%p303) target = $region52
      $region51: #{tpu_custom_call.1} parent=5 // pred_region
        // Predicated region
        $region53: #{tpu_custom_call.1} parent=51 // pred_check
          %p306 = pneg %p39
        $region54: #{tpu_custom_call.1} parent=51 // pred_check_branch
          %308 = sbr.rel (%p306) target = $region56
        $region55: #{tpu_custom_call.1} parent=51 // pred_region
          %p309 = scmp.lt.s32.totalorder %s19, 1
          %s310 = scalar_select %p309, %s19, 1
          %s311 = smul.addr %s310, 8
          %s312 = scalar_lea.vmem %s0, %s311
        $region56: #{tpu_custom_call.1} parent=51 // pred_fallthru
          _
      $region52: #{tpu_custom_call.1} parent=5 // pred_fallthru
        _
      %p313 = scmp.le.s32.totalorder 1, %s19
      %p314 = scmp.lt.s32.totalorder %s19, 3
      %p315 = pnand %p313, %p314
      %p316 = pneg %p315
      // Predicated region
      $region57: #{tpu_custom_call.1} parent=5 // pred_check
        _
      $region58: #{tpu_custom_call.1} parent=5 // pred_check_branch
        %318 = sbr.rel (%p315) target = $region60
      $region59: #{tpu_custom_call.1} parent=5 // pred_region
        %s319 = ssub.s32 %s19, 1
        %p320 = scmp.lt.s32.totalorder %s24, 1
        %s321 = scalar_select %p320, %s24, 1
        %s322 = smul.addr %s321, 8
        %s323 = scalar_lea.vmem %s0, %s322
        %p324 = pneg %p45
        %p325 = pneg %p42
        %p326 = pneg %p66
        %p327 = pneg %p63
        %p328 = pneg %p87
        %p329 = pneg %p84
        %p330 = pneg %p108
        %p331 = pneg %p105
        %p332 = pneg %p129
        %p333 = pneg %p126
        %p334 = pneg %p150
        %p335 = pneg %p147
        %p336 = pneg %p171
        %p337 = pneg %p168
        %p338 = pneg %p192
        %p339 = pneg %p189
        %p340 = pneg %p213
        %p341 = pneg %p210
        %p342 = pneg %p234
        %p343 = pneg %p231
        %p344 = pneg %p260
        %p345 = pneg %p257
        %s346 = sand.u32 %s247, 1
        %s347 = scalar_lea.sflag [#allocation3], %s346
        %s348 = sand.u32 %s247, 1
        %s349 = smul.addr %s348, 4
        %s350 = scalar_lea.vmem [#allocation2], %s349
        %p351 = scmp.lt.s32.totalorder %s24, 1
        %s352 = scalar_select %p351, %s24, 1
        %s353 = smul.addr %s352, 8
        %s354 = scalar_lea.vmem %s0, %s353
        %v356 = vld [vmem:[%s354] sm:$0xff]
        %v357 = vld [vmem:[%s1] sm:$0x1]
        %v358 = vld [vmem:[%s2] sm:$0x1]
        %vm359 = vcmask 261120
        %v360 = vsel %vm359, %v356, 0.0
        %361 = vadd.xlane.f32.xlu0 %v360
        %v362 = vpop.xlane.xlu0 %361
        %v363 = vrcp.pop 32.0
        %v364 = vmul.f32 %v362, %v363
        %v365 = vsub.f32 %v356, %v364
        %v366 = vmul.f32 %v365, %v365
        %v367 = vsel %vm359, %v366, 0.0
        %368 = vadd.xlane.f32.xlu0 %v367
        %v369 = vpop.xlane.xlu0 %368
        %v370 = vmul.f32 %v369, %v363
        %v371 = vadd.f32 %v370, 1e-05
        %v372 = vrsqrt.pop %v371
        %v373 = vmul.f32 %v365, %v372
        %v375 = vlaneseq
        %v376 = vshrl.u32 %v375, 7
        %v377 = vsub.s32 0, %v376
        %v378 = vrot.slane %v357, %v377
        %v380 = vmul.f32 %v378, %v373
        %v382 = vlaneseq
        %v383 = vshrl.u32 %v382, 7
        %v384 = vsub.s32 0, %v383
        %v385 = vrot.slane %v358, %v384
        %v387 = vadd.f32 %v380, %v385
        %v388 = vpack.c.bf16 %v387, %v387
        %v389 = vld [vmem:[%s3] sm:$0xf]
        %v390 = vld [vmem:[%s3 + $0x4] sm:$0xf]
        %v391 = vld [vmem:[%s3 + $0x8] sm:$0xf]
        %v392 = vld [vmem:[%s3 + $0xc] sm:$0xf]
        %v397 = vunpack.c.l.b16 %v389
        %v398 = vunpack.c.l.b16 %v390
        %v399 = vunpack.c.l.b16 %v391
        %v400 = vunpack.c.l.b16 %v392
        %v401 = vpack.c.b16 %v398, %v397
        %v402 = vpack.c.b16 %v400, %v399
        %v406 = vsel %vm359, %v388, 0
        %408 = vmatprep.subr.bf16.mxu0 0
        %409 = vmatpush1.bf16.msra.mxu0 0
        %410 = vmatprep.subr.bf16.mxu0 0
        %411 = vmatpush1.bf16.msra.mxu0 0
        %412 = vmatprep.subr.bf16.mxu0 0
        %413 = vmatpush1.bf16.msra.mxu0 0
        %414 = vmatprep.subr.bf16.mxu0 0
        %415 = vmatpush1.bf16.msra.mxu0 0
        %416 = vmatprep.subr.bf16.mxu0 0
        %417 = vmatpush1.bf16.msra.mxu0 0
        %418 = vmatprep.subr.bf16.mxu0 0
        %419 = vmatpush1.bf16.msra.mxu0 0
        %420 = vmatprep.subr.bf16.mxu0 0
        %421 = vmatpush1.bf16.msra.mxu0 %v402
        %422 = vmatprep.subr.bf16.mxu0 0
        %423 = vmatpush1.bf16.msra.mxu0 %v401
        %424 = vmatprep.subr.bf16.mxu0 0
        %425 = vmatpush2.bf16.msra.mxu0 0
        %426 = vmatprep.subr.bf16.mxu0 0
        %427 = vmatpush2.bf16.msra.mxu0 0
        %428 = vmatprep.subr.bf16.mxu0 0
        %429 = vmatpush2.bf16.msra.mxu0 0
        %430 = vmatprep.subr.bf16.mxu0 0
        %431 = vmatpush2.bf16.msra.mxu0 0
        %432 = vmatprep.subr.bf16.mxu0 0
        %433 = vmatpush2.bf16.msra.mxu0 0
        %434 = vmatprep.subr.bf16.mxu0 0
        %435 = vmatpush2.bf16.msra.mxu0 0
        %436 = vmatprep.subr.bf16.mxu0 0
        %437 = vmatpush2.bf16.msra.mxu0 0
        %438 = vmatprep.subr.bf16.mxu0 0
        %439 = vmatpush2.bf16.msra.mxu0 0
        %440 = vmatprep.mubr.bf16.mxu0 0
        %441 = vmatmul.mubr.bf16.gmra.mxu0 %v406
        %v442 = vpop.f32.mrf.mxu0
        %v443 = vadd.f32 0.0, %v442
        %v444 = vpop.f32.mrf.mxu0
        %v445 = vpop.f32.mrf.mxu0
        %v446 = vpop.f32.mrf.mxu0
        %447 = vdwg.mxu0
        %v448 = vmul.f32 %v443, 0.35355338
        %450 = vrot.lane.b32.xlu0 %v448, 120
        %v451 = vpop.permute.xlu0 %450
        %453 = vrot.lane.b32.xlu0 %v448, 112
        %v454 = vpop.permute.xlu0 %453
        %456 = vrot.lane.b32.xlu0 %v448, 104
        %v457 = vpop.permute.xlu0 %456
        %v459 = vcombine.low %v448, %v454
        %v460 = vcombine.high %v448, %v454
        %v462 = vunpack.c.l.s4 1983009808
        %v463 = vunpack.c.0.s8 %v462
        %v464 = vlaneseq
        %v465 = vshrl.u32 %v464, 7
        %v466 = vsub.s32 %v463, %v465
        %v467 = vrot.slane %v459, %v466
        %v469 = vunpack.c.l.s4 1983009808
        %v470 = vunpack.c.0.s8 %v469
        %v471 = vlaneseq
        %v472 = vshrl.u32 %v471, 7
        %v473 = vsub.s32 %v470, %v472
        %v474 = vrot.slane %v460, %v473
        %v475 = vcombine.low %v451, %v457
        %v476 = vcombine.high %v451, %v457
        %v478 = vunpack.c.l.s4 1983009808
        %v479 = vunpack.c.0.s8 %v478
        %v480 = vlaneseq
        %v481 = vshrl.u32 %v480, 7
        %v482 = vsub.s32 %v479, %v481
        %v483 = vrot.slane %v475, %v482
        %v485 = vunpack.c.l.s4 1983009808
        %v486 = vunpack.c.0.s8 %v485
        %v487 = vlaneseq
        %v488 = vshrl.u32 %v487, 7
        %v489 = vsub.s32 %v486, %v488
        %v490 = vrot.slane %v476, %v489
        %v491 = vcombine.low %v467, %v483
        %v492 = vcombine.high %v467, %v483
        %v494 = vunpack.c.l.s4 1934713408
        %v495 = vunpack.c.0.s8 %v494
        %v496 = vlaneseq
        %v497 = vshrl.u32 %v496, 7
        %v498 = vsub.s32 %v495, %v497
        %v499 = vrot.slane %v491, %v498
        %v501 = vunpack.c.l.s4 1934713408
        %v502 = vunpack.c.0.s8 %v501
        %v503 = vlaneseq
        %v504 = vshrl.u32 %v503, 7
        %v505 = vsub.s32 %v502, %v504
        %v506 = vrot.slane %v492, %v505
        %v507 = vcombine.low %v474, %v490
        %v508 = vcombine.high %v474, %v490
        %v510 = vunpack.c.l.s4 1934713408
        %v511 = vunpack.c.0.s8 %v510
        %v512 = vlaneseq
        %v513 = vshrl.u32 %v512, 7
        %v514 = vsub.s32 %v511, %v513
        %v515 = vrot.slane %v507, %v514
        %v517 = vunpack.c.l.s4 1934713408
        %v518 = vunpack.c.0.s8 %v517
        %v519 = vlaneseq
        %v520 = vshrl.u32 %v519, 7
        %v521 = vsub.s32 %v518, %v520
        %v522 = vrot.slane %v508, %v521
        %v523 = vcombine.high %v499, 0.0
        %v524 = vcombine.high %v506, 0.0
        %v525 = vcombine.high %v515, 0.0
        %v526 = vcombine.high %v522, 0.0
        %528 = vrot.lane.b32.xlu0 %v443, 120
        %v529 = vpop.permute.xlu0 %528
        %530 = vrot.lane.b32.xlu0 %v443, 112
        %v531 = vpop.permute.xlu0 %530
        %532 = vrot.lane.b32.xlu0 %v443, 104
        %v533 = vpop.permute.xlu0 %532
        %534 = vrot.lane.b32.xlu0 %v443, 96
        %v535 = vpop.permute.xlu0 %534
        %536 = vrot.lane.b32.xlu0 %v529, 96
        %v537 = vpop.permute.xlu0 %536
        %538 = vrot.lane.b32.xlu0 %v531, 96
        %v539 = vpop.permute.xlu0 %538
        %540 = vrot.lane.b32.xlu0 %v533, 96
        %v541 = vpop.permute.xlu0 %540
        %v546 = vcombine.low %v535, %v539
        %v547 = vcombine.high %v535, %v539
        %v549 = vunpack.c.l.s4 1983009808
        %v550 = vunpack.c.0.s8 %v549
        %v551 = vlaneseq
        %v552 = vshrl.u32 %v551, 7
        %v553 = vsub.s32 %v550, %v552
        %v554 = vrot.slane %v546, %v553
        %v556 = vunpack.c.l.s4 1983009808
        %v557 = vunpack.c.0.s8 %v556
        %v558 = vlaneseq
        %v559 = vshrl.u32 %v558, 7
        %v560 = vsub.s32 %v557, %v559
        %v561 = vrot.slane %v547, %v560
        %v562 = vcombine.low %v537, %v541
        %v563 = vcombine.high %v537, %v541
        %v565 = vunpack.c.l.s4 1983009808
        %v566 = vunpack.c.0.s8 %v565
        %v567 = vlaneseq
        %v568 = vshrl.u32 %v567, 7
        %v569 = vsub.s32 %v566, %v568
        %v570 = vrot.slane %v562, %v569
        %v572 = vunpack.c.l.s4 1983009808
        %v573 = vunpack.c.0.s8 %v572
        %v574 = vlaneseq
        %v575 = vshrl.u32 %v574, 7
        %v576 = vsub.s32 %v573, %v575
        %v577 = vrot.slane %v563, %v576
        %v578 = vcombine.low %v554, %v570
        %v579 = vcombine.high %v554, %v570
        %v581 = vunpack.c.l.s4 1934713408
        %v582 = vunpack.c.0.s8 %v581
        %v583 = vlaneseq
        %v584 = vshrl.u32 %v583, 7
        %v585 = vsub.s32 %v582, %v584
        %v586 = vrot.slane %v578, %v585
        %v588 = vunpack.c.l.s4 1934713408
        %v589 = vunpack.c.0.s8 %v588
        %v590 = vlaneseq
        %v591 = vshrl.u32 %v590, 7
        %v592 = vsub.s32 %v589, %v591
        %v593 = vrot.slane %v579, %v592
        %v594 = vcombine.low %v561, %v577
        %v595 = vcombine.high %v561, %v577
        %v597 = vunpack.c.l.s4 1934713408
        %v598 = vunpack.c.0.s8 %v597
        %v599 = vlaneseq
        %v600 = vshrl.u32 %v599, 7
        %v601 = vsub.s32 %v598, %v600
        %v602 = vrot.slane %v594, %v601
        %v604 = vunpack.c.l.s4 1934713408
        %v605 = vunpack.c.0.s8 %v604
        %v606 = vlaneseq
        %v607 = vshrl.u32 %v606, 7
        %v608 = vsub.s32 %v605, %v607
        %v609 = vrot.slane %v595, %v608
        %v610 = vcombine.high %v586, 0.0
        %v611 = vcombine.high %v593, 0.0
        %v612 = vcombine.high %v602, 0.0
        %v613 = vcombine.high %v609, 0.0
        %614 = vrot.lane.b32.xlu0 %v443, 64
        %v615 = vpop.permute.xlu0 %614
        %616 = vrot.lane.b32.xlu0 %v529, 64
        %v617 = vpop.permute.xlu0 %616
        %618 = vrot.lane.b32.xlu0 %v531, 64
        %v619 = vpop.permute.xlu0 %618
        %620 = vrot.lane.b32.xlu0 %v533, 64
        %v621 = vpop.permute.xlu0 %620
        %v626 = vcombine.low %v615, %v619
        %v627 = vcombine.high %v615, %v619
        %v629 = vunpack.c.l.s4 1983009808
        %v630 = vunpack.c.0.s8 %v629
        %v631 = vlaneseq
        %v632 = vshrl.u32 %v631, 7
        %v633 = vsub.s32 %v630, %v632
        %v634 = vrot.slane %v626, %v633
        %v636 = vunpack.c.l.s4 1983009808
        %v637 = vunpack.c.0.s8 %v636
        %v638 = vlaneseq
        %v639 = vshrl.u32 %v638, 7
        %v640 = vsub.s32 %v637, %v639
        %v641 = vrot.slane %v627, %v640
        %v642 = vcombine.low %v617, %v621
        %v643 = vcombine.high %v617, %v621
        %v645 = vunpack.c.l.s4 1983009808
        %v646 = vunpack.c.0.s8 %v645
        %v647 = vlaneseq
        %v648 = vshrl.u32 %v647, 7
        %v649 = vsub.s32 %v646, %v648
        %v650 = vrot.slane %v642, %v649
        %v652 = vunpack.c.l.s4 1983009808
        %v653 = vunpack.c.0.s8 %v652
        %v654 = vlaneseq
        %v655 = vshrl.u32 %v654, 7
        %v656 = vsub.s32 %v653, %v655
        %v657 = vrot.slane %v643, %v656
        %v658 = vcombine.low %v634, %v650
        %v659 = vcombine.high %v634, %v650
        %v661 = vunpack.c.l.s4 1934713408
        %v662 = vunpack.c.0.s8 %v661
        %v663 = vlaneseq
        %v664 = vshrl.u32 %v663, 7
        %v665 = vsub.s32 %v662, %v664
        %v666 = vrot.slane %v658, %v665
        %v668 = vunpack.c.l.s4 1934713408
        %v669 = vunpack.c.0.s8 %v668
        %v670 = vlaneseq
        %v671 = vshrl.u32 %v670, 7
        %v672 = vsub.s32 %v669, %v671
        %v673 = vrot.slane %v659, %v672
        %v674 = vcombine.low %v641, %v657
        %v675 = vcombine.high %v641, %v657
        %v677 = vunpack.c.l.s4 1934713408
        %v678 = vunpack.c.0.s8 %v677
        %v679 = vlaneseq
        %v680 = vshrl.u32 %v679, 7
        %v681 = vsub.s32 %v678, %v680
        %v682 = vrot.slane %v674, %v681
        %v684 = vunpack.c.l.s4 1934713408
        %v685 = vunpack.c.0.s8 %v684
        %v686 = vlaneseq
        %v687 = vshrl.u32 %v686, 7
        %v688 = vsub.s32 %v685, %v687
        %v689 = vrot.slane %v675, %v688
        %v690 = vcombine.high %v666, 0.0
        %v691 = vcombine.high %v673, 0.0
        %v692 = vcombine.high %v682, 0.0
        %v693 = vcombine.high %v689, 0.0
        %v694 = vcombine.low %v499, %v506
        %v696 = vunpack.c.l.s4 1983009808
        %v697 = vunpack.c.0.s8 %v696
        %v698 = vlaneseq
        %v699 = vshrl.u32 %v698, 7
        %v700 = vsub.s32 %v697, %v699
        %v701 = vrot.slane %v694, %v700
        %v702 = vcombine.low %v523, %v524
        %v704 = vunpack.c.l.s4 1983009808
        %v705 = vunpack.c.0.s8 %v704
        %v706 = vlaneseq
        %v707 = vshrl.u32 %v706, 7
        %v708 = vsub.s32 %v705, %v707
        %v709 = vrot.slane %v702, %v708
        %v710 = vcombine.low %v515, %v522
        %v712 = vunpack.c.l.s4 1983009808
        %v713 = vunpack.c.0.s8 %v712
        %v714 = vlaneseq
        %v715 = vshrl.u32 %v714, 7
        %v716 = vsub.s32 %v713, %v715
        %v717 = vrot.slane %v710, %v716
        %v718 = vcombine.low %v525, %v526
        %v720 = vunpack.c.l.s4 1983009808
        %v721 = vunpack.c.0.s8 %v720
        %v722 = vlaneseq
        %v723 = vshrl.u32 %v722, 7
        %v724 = vsub.s32 %v721, %v723
        %v725 = vrot.slane %v718, %v724
        %v726 = vcombine.low %v701, %v709
        %v727 = vcombine.high %v701, %v709
        %v729 = vunpack.c.l.s4 1934713408
        %v730 = vunpack.c.0.s8 %v729
        %v731 = vlaneseq
        %v732 = vshrl.u32 %v731, 7
        %v733 = vsub.s32 %v730, %v732
        %v734 = vrot.slane %v726, %v733
        %v736 = vunpack.c.l.s4 1934713408
        %v737 = vunpack.c.0.s8 %v736
        %v738 = vlaneseq
        %v739 = vshrl.u32 %v738, 7
        %v740 = vsub.s32 %v737, %v739
        %v741 = vrot.slane %v727, %v740
        %v742 = vcombine.low %v717, %v725
        %v743 = vcombine.high %v717, %v725
        %v745 = vunpack.c.l.s4 1934713408
        %v746 = vunpack.c.0.s8 %v745
        %v747 = vlaneseq
        %v748 = vshrl.u32 %v747, 7
        %v749 = vsub.s32 %v746, %v748
        %v750 = vrot.slane %v742, %v749
        %v752 = vunpack.c.l.s4 1934713408
        %v753 = vunpack.c.0.s8 %v752
        %v754 = vlaneseq
        %v755 = vshrl.u32 %v754, 7
        %v756 = vsub.s32 %v753, %v755
        %v757 = vrot.slane %v743, %v756
        %v758 = vcombine.low %v734, %v750
        %v759 = vcombine.high %v734, %v750
        %v760 = vcombine.low %v741, %v757
        %v761 = vcombine.high %v741, %v757
        %v762 = vpack.c.bf16 %v758, %v758
        %v763 = vpack.c.bf16 %v759, %v759
        %v764 = vpack.c.bf16 %v760, %v760
        %v765 = vpack.c.bf16 %v761, %v761
        %v766 = vcombine.low %v586, %v593
        %v768 = vunpack.c.l.s4 1983009808
        %v769 = vunpack.c.0.s8 %v768
        %v770 = vlaneseq
        %v771 = vshrl.u32 %v770, 7
        %v772 = vsub.s32 %v769, %v771
        %v773 = vrot.slane %v766, %v772
        %v774 = vcombine.low %v610, %v611
        %v776 = vunpack.c.l.s4 1983009808
        %v777 = vunpack.c.0.s8 %v776
        %v778 = vlaneseq
        %v779 = vshrl.u32 %v778, 7
        %v780 = vsub.s32 %v777, %v779
        %v781 = vrot.slane %v774, %v780
        %v782 = vcombine.low %v602, %v609
        %v784 = vunpack.c.l.s4 1983009808
        %v785 = vunpack.c.0.s8 %v784
        %v786 = vlaneseq
        %v787 = vshrl.u32 %v786, 7
        %v788 = vsub.s32 %v785, %v787
        %v789 = vrot.slane %v782, %v788
        %v790 = vcombine.low %v612, %v613
        %v792 = vunpack.c.l.s4 1983009808
        %v793 = vunpack.c.0.s8 %v792
        %v794 = vlaneseq
        %v795 = vshrl.u32 %v794, 7
        %v796 = vsub.s32 %v793, %v795
        %v797 = vrot.slane %v790, %v796
        %v798 = vcombine.low %v773, %v781
        %v799 = vcombine.high %v773, %v781
        %v801 = vunpack.c.l.s4 1934713408
        %v802 = vunpack.c.0.s8 %v801
        %v803 = vlaneseq
        %v804 = vshrl.u32 %v803, 7
        %v805 = vsub.s32 %v802, %v804
        %v806 = vrot.slane %v798, %v805
        %v808 = vunpack.c.l.s4 1934713408
        %v809 = vunpack.c.0.s8 %v808
        %v810 = vlaneseq
        %v811 = vshrl.u32 %v810, 7
        %v812 = vsub.s32 %v809, %v811
        %v813 = vrot.slane %v799, %v812
        %v814 = vcombine.low %v789, %v797
        %v815 = vcombine.high %v789, %v797
        %v817 = vunpack.c.l.s4 1934713408
        %v818 = vunpack.c.0.s8 %v817
        %v819 = vlaneseq
        %v820 = vshrl.u32 %v819, 7
        %v821 = vsub.s32 %v818, %v820
        %v822 = vrot.slane %v814, %v821
        %v824 = vunpack.c.l.s4 1934713408
        %v825 = vunpack.c.0.s8 %v824
        %v826 = vlaneseq
        %v827 = vshrl.u32 %v826, 7
        %v828 = vsub.s32 %v825, %v827
        %v829 = vrot.slane %v815, %v828
        %v830 = vcombine.low %v806, %v822
        %v831 = vcombine.high %v806, %v822
        %v832 = vcombine.low %v813, %v829
        %v833 = vcombine.high %v813, %v829
        %v834 = vpack.c.bf16 %v830, %v830
        %v835 = vpack.c.bf16 %v831, %v831
        %v836 = vpack.c.bf16 %v832, %v832
        %v837 = vpack.c.bf16 %v833, %v833
        %v838 = vcombine.low %v666, %v673
        %v840 = vunpack.c.l.s4 1983009808
        %v841 = vunpack.c.0.s8 %v840
        %v842 = vlaneseq
        %v843 = vshrl.u32 %v842, 7
        %v844 = vsub.s32 %v841, %v843
        %v845 = vrot.slane %v838, %v844
        %v846 = vcombine.low %v690, %v691
        %v848 = vunpack.c.l.s4 1983009808
        %v849 = vunpack.c.0.s8 %v848
        %v850 = vlaneseq
        %v851 = vshrl.u32 %v850, 7
        %v852 = vsub.s32 %v849, %v851
        %v853 = vrot.slane %v846, %v852
        %v854 = vcombine.low %v682, %v689
        %v856 = vunpack.c.l.s4 1983009808
        %v857 = vunpack.c.0.s8 %v856
        %v858 = vlaneseq
        %v859 = vshrl.u32 %v858, 7
        %v860 = vsub.s32 %v857, %v859
        %v861 = vrot.slane %v854, %v860
        %v862 = vcombine.low %v692, %v693
        %v864 = vunpack.c.l.s4 1983009808
        %v865 = vunpack.c.0.s8 %v864
        %v866 = vlaneseq
        %v867 = vshrl.u32 %v866, 7
        %v868 = vsub.s32 %v865, %v867
        %v869 = vrot.slane %v862, %v868
        %v870 = vcombine.low %v845, %v853
        %v871 = vcombine.high %v845, %v853
        %v873 = vunpack.c.l.s4 1934713408
        %v874 = vunpack.c.0.s8 %v873
        %v875 = vlaneseq
        %v876 = vshrl.u32 %v875, 7
        %v877 = vsub.s32 %v874, %v876
        %v878 = vrot.slane %v870, %v877
        %v880 = vunpack.c.l.s4 1934713408
        %v881 = vunpack.c.0.s8 %v880
        %v882 = vlaneseq
        %v883 = vshrl.u32 %v882, 7
        %v884 = vsub.s32 %v881, %v883
        %v885 = vrot.slane %v871, %v884
        %v886 = vcombine.low %v861, %v869
        %v887 = vcombine.high %v861, %v869
        %v889 = vunpack.c.l.s4 1934713408
        %v890 = vunpack.c.0.s8 %v889
        %v891 = vlaneseq
        %v892 = vshrl.u32 %v891, 7
        %v893 = vsub.s32 %v890, %v892
        %v894 = vrot.slane %v886, %v893
        %v896 = vunpack.c.l.s4 1934713408
        %v897 = vunpack.c.0.s8 %v896
        %v898 = vlaneseq
        %v899 = vshrl.u32 %v898, 7
        %v900 = vsub.s32 %v897, %v899
        %v901 = vrot.slane %v887, %v900
        %v902 = vcombine.low %v878, %v894
        %v903 = vcombine.high %v878, %v894
        %v904 = vcombine.low %v885, %v901
        %v905 = vcombine.high %v885, %v901
        %v906 = vpack.c.bf16 %v902, %v902
        %v907 = vpack.c.bf16 %v903, %v903
        %v908 = vpack.c.bf16 %v904, %v904
        %v909 = vpack.c.bf16 %v905, %v905
        %vm910 = vcmask 64512
        %v912 = vsel %vm910, %v762, 0
        %v915 = vsel %vm910, %v834, 0
        %917 = vmatprep.subr.bf16.mxu0 0
        %918 = vmatpush1.bf16.xpose.msra.mxu0 0
        %919 = vmatprep.subr.bf16.mxu0 0
        %920 = vmatpush1.bf16.xpose.msra.mxu0 0
        %921 = vmatprep.subr.bf16.mxu0 0
        %922 = vmatpush1.bf16.xpose.msra.mxu0 0
        %923 = vmatprep.subr.bf16.mxu0 0
        %924 = vmatpush1.bf16.xpose.msra.mxu0 0
        %925 = vmatprep.subr.bf16.mxu0 0
        %926 = vmatpush1.bf16.xpose.msra.mxu0 0
        %927 = vmatprep.subr.bf16.mxu0 0
        %928 = vmatpush1.bf16.xpose.msra.mxu0 0
        %929 = vmatprep.subr.bf16.mxu0 0
        %930 = vmatpush1.bf16.xpose.msra.mxu0 0
        %931 = vmatprep.subr.bf16.mxu0 0
        %932 = vmatpush1.bf16.xpose.msra.mxu0 %v915
        %933 = vmatprep.subr.bf16.mxu0 0
        %934 = vmatpush2.bf16.xpose.msra.mxu0 0
        %935 = vmatprep.subr.bf16.mxu0 0
        %936 = vmatpush2.bf16.xpose.msra.mxu0 0
        %937 = vmatprep.subr.bf16.mxu0 0
        %938 = vmatpush2.bf16.xpose.msra.mxu0 0
        %939 = vmatprep.subr.bf16.mxu0 0
        %940 = vmatpush2.bf16.xpose.msra.mxu0 0
        %941 = vmatprep.subr.bf16.mxu0 0
        %942 = vmatpush2.bf16.xpose.msra.mxu0 0
        %943 = vmatprep.subr.bf16.mxu0 0
        %944 = vmatpush2.bf16.xpose.msra.mxu0 0
        %945 = vmatprep.subr.bf16.mxu0 0
        %946 = vmatpush2.bf16.xpose.msra.mxu0 0
        %947 = vmatprep.subr.bf16.mxu0 0
        %948 = vmatpush2.bf16.xpose.msra.mxu0 0
        %949 = vmatprep.mubr.bf16.mxu0 0
        %950 = vmatmul.mubr.bf16.gmra.mxu0 %v912
        %v951 = vpop.f32.mrf.mxu0
        %v952 = vadd.f32 0.0, %v951
        %v953 = vpop.f32.mrf.mxu0
        %v954 = vpop.f32.mrf.mxu0
        %v955 = vpop.f32.mrf.mxu0
        %956 = vdwg.mxu0
        %v958 = vsel %vm910, %v763, 0
        %v961 = vsel %vm910, %v835, 0
        %963 = vmatprep.subr.bf16.mxu0 0
        %964 = vmatpush1.bf16.xpose.msra.mxu0 0
        %965 = vmatprep.subr.bf16.mxu0 0
        %966 = vmatpush1.bf16.xpose.msra.mxu0 0
        %967 = vmatprep.subr.bf16.mxu0 0
        %968 = vmatpush1.bf16.xpose.msra.mxu0 0
        %969 = vmatprep.subr.bf16.mxu0 0
        %970 = vmatpush1.bf16.xpose.msra.mxu0 0
        %971 = vmatprep.subr.bf16.mxu0 0
        %972 = vmatpush1.bf16.xpose.msra.mxu0 0
        %973 = vmatprep.subr.bf16.mxu0 0
        %974 = vmatpush1.bf16.xpose.msra.mxu0 0
        %975 = vmatprep.subr.bf16.mxu0 0
        %976 = vmatpush1.bf16.xpose.msra.mxu0 0
        %977 = vmatprep.subr.bf16.mxu0 0
        %978 = vmatpush1.bf16.xpose.msra.mxu0 %v961
        %979 = vmatprep.subr.bf16.mxu0 0
        %980 = vmatpush2.bf16.xpose.msra.mxu0 0
        %981 = vmatprep.subr.bf16.mxu0 0
        %982 = vmatpush2.bf16.xpose.msra.mxu0 0
        %983 = vmatprep.subr.bf16.mxu0 0
        %984 = vmatpush2.bf16.xpose.msra.mxu0 0
        %985 = vmatprep.subr.bf16.mxu0 0
        %986 = vmatpush2.bf16.xpose.msra.mxu0 0
        %987 = vmatprep.subr.bf16.mxu0 0
        %988 = vmatpush2.bf16.xpose.msra.mxu0 0
        %989 = vmatprep.subr.bf16.mxu0 0
        %990 = vmatpush2.bf16.xpose.msra.mxu0 0
        %991 = vmatprep.subr.bf16.mxu0 0
        %992 = vmatpush2.bf16.xpose.msra.mxu0 0
        %993 = vmatprep.subr.bf16.mxu0 0
        %994 = vmatpush2.bf16.xpose.msra.mxu0 0
        %995 = vmatprep.mubr.bf16.mxu0 0
        %996 = vmatmul.mubr.bf16.gmra.mxu0 %v958
        %v997 = vpop.f32.mrf.mxu0
        %v998 = vadd.f32 0.0, %v997
        %v999 = vpop.f32.mrf.mxu0
        %v1000 = vpop.f32.mrf.mxu0
        %v1001 = vpop.f32.mrf.mxu0
        %1002 = vdwg.mxu0
        %v1004 = vsel %vm910, %v764, 0
        %v1007 = vsel %vm910, %v836, 0
        %1009 = vmatprep.subr.bf16.mxu0 0
        %1010 = vmatpush1.bf16.xpose.msra.mxu0 0
        %1011 = vmatprep.subr.bf16.mxu0 0
        %1012 = vmatpush1.bf16.xpose.msra.mxu0 0
        %1013 = vmatprep.subr.bf16.mxu0 0
        %1014 = vmatpush1.bf16.xpose.msra.mxu0 0
        %1015 = vmatprep.subr.bf16.mxu0 0
        %1016 = vmatpush1.bf16.xpose.msra.mxu0 0
        %1017 = vmatprep.subr.bf16.mxu0 0
        %1018 = vmatpush1.bf16.xpose.msra.mxu0 0
        %1019 = vmatprep.subr.bf16.mxu0 0
        %1020 = vmatpush1.bf16.xpose.msra.mxu0 0
        %1021 = vmatprep.subr.bf16.mxu0 0
        %1022 = vmatpush1.bf16.xpose.msra.mxu0 0
        %1023 = vmatprep.subr.bf16.mxu0 0
        %1024 = vmatpush1.bf16.xpose.msra.mxu0 %v1007
        %1025 = vmatprep.subr.bf16.mxu0 0
        %1026 = vmatpush2.bf16.xpose.msra.mxu0 0
        %1027 = vmatprep.subr.bf16.mxu0 0
        %1028 = vmatpush2.bf16.xpose.msra.mxu0 0
        %1029 = vmatprep.subr.bf16.mxu0 0
        %1030 = vmatpush2.bf16.xpose.msra.mxu0 0
        %1031 = vmatprep.subr.bf16.mxu0 0
        %1032 = vmatpush2.bf16.xpose.msra.mxu0 0
        %1033 = vmatprep.subr.bf16.mxu0 0
        %1034 = vmatpush2.bf16.xpose.msra.mxu0 0
        %1035 = vmatprep.subr.bf16.mxu0 0
        %1036 = vmatpush2.bf16.xpose.msra.mxu0 0
        %1037 = vmatprep.subr.bf16.mxu0 0
        %1038 = vmatpush2.bf16.xpose.msra.mxu0 0
        %1039 = vmatprep.subr.bf16.mxu0 0
        %1040 = vmatpush2.bf16.xpose.msra.mxu0 0
        %1041 = vmatprep.mubr.bf16.mxu0 0
        %1042 = vmatmul.mubr.bf16.gmra.mxu0 %v1004
        %v1043 = vpop.f32.mrf.mxu0
        %v1044 = vadd.f32 0.0, %v1043
        %v1045 = vpop.f32.mrf.mxu0
        %v1046 = vpop.f32.mrf.mxu0
        %v1047 = vpop.f32.mrf.mxu0
        %1048 = vdwg.mxu0
        %v1050 = vsel %vm910, %v765, 0
        %v1053 = vsel %vm910, %v837, 0
        %1055 = vmatprep.subr.bf16.mxu0 0
        %1056 = vmatpush1.bf16.xpose.msra.mxu0 0
        %1057 = vmatprep.subr.bf16.mxu0 0
        %1058 = vmatpush1.bf16.xpose.msra.mxu0 0
        %1059 = vmatprep.subr.bf16.mxu0 0
        %1060 = vmatpush1.bf16.xpose.msra.mxu0 0
        %1061 = vmatprep.subr.bf16.mxu0 0
        %1062 = vmatpush1.bf16.xpose.msra.mxu0 0
        %1063 = vmatprep.subr.bf16.mxu0 0
        %1064 = vmatpush1.bf16.xpose.msra.mxu0 0
        %1065 = vmatprep.subr.bf16.mxu0 0
        %1066 = vmatpush1.bf16.xpose.msra.mxu0 0
        %1067 = vmatprep.subr.bf16.mxu0 0
        %1068 = vmatpush1.bf16.xpose.msra.mxu0 0
        %1069 = vmatprep.subr.bf16.mxu0 0
        %1070 = vmatpush1.bf16.xpose.msra.mxu0 %v1053
        %1071 = vmatprep.subr.bf16.mxu0 0
        %1072 = vmatpush2.bf16.xpose.msra.mxu0 0
        %1073 = vmatprep.subr.bf16.mxu0 0
        %1074 = vmatpush2.bf16.xpose.msra.mxu0 0
        %1075 = vmatprep.subr.bf16.mxu0 0
        %1076 = vmatpush2.bf16.xpose.msra.mxu0 0
        %1077 = vmatprep.subr.bf16.mxu0 0
        %1078 = vmatpush2.bf16.xpose.msra.mxu0 0
        %1079 = vmatprep.subr.bf16.mxu0 0
        %1080 = vmatpush2.bf16.xpose.msra.mxu0 0
        %1081 = vmatprep.subr.bf16.mxu0 0
        %1082 = vmatpush2.bf16.xpose.msra.mxu0 0
        %1083 = vmatprep.subr.bf16.mxu0 0
        %1084 = vmatpush2.bf16.xpose.msra.mxu0 0
        %1085 = vmatprep.subr.bf16.mxu0 0
        %1086 = vmatpush2.bf16.xpose.msra.mxu0 0
        %1087 = vmatprep.mubr.bf16.mxu0 0
        %1088 = vmatmul.mubr.bf16.gmra.mxu0 %v1050
        %v1089 = vpop.f32.mrf.mxu0
        %v1090 = vadd.f32 0.0, %v1089
        %v1091 = vpop.f32.mrf.mxu0
        %v1092 = vpop.f32.mrf.mxu0
        %v1093 = vpop.f32.mrf.mxu0
        %1094 = vdwg.mxu0
        %v1095 = vlaneseq
        %v1096 = vshrl.u32 %v1095, 7
        %v1097 = vlaneseq
        %v1098 = vand.u32 %v1097, 127
        %vm1099 = vcmp.le.s32.totalorder %v1098, %v1096
        %v1100 = vsel %vm1099, 1, 0
        %vm1101 = vcmp.eq.s32.totalorder %v1100, 1
        %v1102 = vsel %vm1101, %v952, -1e+30
        %v1103 = vsel %vm1101, %v998, -1e+30
        %v1104 = vsel %vm1101, %v1044, -1e+30
        %v1105 = vsel %vm1101, %v1090, -1e+30
        %v1106 = vsel %vm910, %v1102, -inf
        %1107 = vmax.xlane.f32.xlu0 %v1106
        %v1108 = vpop.xlane.xlu0 %1107
        %v1109 = vsel %vm910, %v1103, -inf
        %1110 = vmax.xlane.f32.xlu0 %v1109
        %v1111 = vpop.xlane.xlu0 %1110
        %v1112 = vsel %vm910, %v1104, -inf
        %1113 = vmax.xlane.f32.xlu0 %v1112
        %v1114 = vpop.xlane.xlu0 %1113
        %v1115 = vsel %vm910, %v1105, -inf
        %1116 = vmax.xlane.f32.xlu0 %v1115
        %v1117 = vpop.xlane.xlu0 %1116
        %v1118 = vsub.f32 %v1102, %v1108
        %v1119 = vsub.f32 %v1103, %v1111
        %v1120 = vsub.f32 %v1104, %v1114
        %v1121 = vsub.f32 %v1105, %v1117
        %v1122 = vmul.f32 %v1118, 1.442695
        %v1123 = vpow.pop %v1122
        %v1124 = vmul.f32 %v1119, 1.442695
        %v1125 = vpow.pop %v1124
        %v1126 = vmul.f32 %v1120, 1.442695
        %v1127 = vpow.pop %v1126
        %v1128 = vmul.f32 %v1121, 1.442695
        %v1129 = vpow.pop %v1128
        %v1130 = vsel %vm910, %v1123, 0.0
        %1131 = vadd.xlane.f32.xlu0 %v1130
        %v1132 = vpop.xlane.xlu0 %1131
        %v1133 = vsel %vm910, %v1125, 0.0
        %1134 = vadd.xlane.f32.xlu0 %v1133
        %v1135 = vpop.xlane.xlu0 %1134
        %v1136 = vsel %vm910, %v1127, 0.0
        %1137 = vadd.xlane.f32.xlu0 %v1136
        %v1138 = vpop.xlane.xlu0 %1137
        %v1139 = vsel %vm910, %v1129, 0.0
        %1140 = vadd.xlane.f32.xlu0 %v1139
        %v1141 = vpop.xlane.xlu0 %1140
        %v1142 = vrcp.pop %v1132
        %v1143 = vrcp.pop %v1135
        %v1144 = vrcp.pop %v1138
        %v1145 = vrcp.pop %v1141
        %v1146 = vmul.f32 %v1123, %v1142
        %v1147 = vmul.f32 %v1125, %v1143
        %v1148 = vmul.f32 %v1127, %v1144
        %v1149 = vmul.f32 %v1129, %v1145
        %v1150 = vpack.c.bf16 %v1146, %v1146
        %v1151 = vpack.c.bf16 %v1147, %v1147
        %v1152 = vpack.c.bf16 %v1148, %v1148
        %v1153 = vpack.c.bf16 %v1149, %v1149
        %v1155 = vsel %vm910, %v1150, 0
        %vm1157 = vcmask 1043456
        %v1159 = vsel %vm1157, %v906, 0
        %1161 = vmatprep.subr.bf16.mxu0 0
        %1162 = vmatpush1.bf16.msra.mxu0 0
        %1163 = vmatprep.subr.bf16.mxu0 0
        %1164 = vmatpush1.bf16.msra.mxu0 0
        %1165 = vmatprep.subr.bf16.mxu0 0
        %1166 = vmatpush1.bf16.msra.mxu0 0
        %1167 = vmatprep.subr.bf16.mxu0 0
        %1168 = vmatpush1.bf16.msra.mxu0 0
        %1169 = vmatprep.subr.bf16.mxu0 0
        %1170 = vmatpush1.bf16.msra.mxu0 0
        %1171 = vmatprep.subr.bf16.mxu0 0
        %1172 = vmatpush1.bf16.msra.mxu0 0
        %1173 = vmatprep.subr.bf16.mxu0 0
        %1174 = vmatpush1.bf16.msra.mxu0 0
        %1175 = vmatprep.subr.bf16.mxu0 0
        %1176 = vmatpush1.bf16.msra.mxu0 %v1159
        %1177 = vmatprep.subr.bf16.mxu0 0
        %1178 = vmatpush2.bf16.msra.mxu0 0
        %1179 = vmatprep.subr.bf16.mxu0 0
        %1180 = vmatpush2.bf16.msra.mxu0 0
        %1181 = vmatprep.subr.bf16.mxu0 0
        %1182 = vmatpush2.bf16.msra.mxu0 0
        %1183 = vmatprep.subr.bf16.mxu0 0
        %1184 = vmatpush2.bf16.msra.mxu0 0
        %1185 = vmatprep.subr.bf16.mxu0 0
        %1186 = vmatpush2.bf16.msra.mxu0 0
        %1187 = vmatprep.subr.bf16.mxu0 0
        %1188 = vmatpush2.bf16.msra.mxu0 0
        %1189 = vmatprep.subr.bf16.mxu0 0
        %1190 = vmatpush2.bf16.msra.mxu0 0
        %1191 = vmatprep.subr.bf16.mxu0 0
        %1192 = vmatpush2.bf16.msra.mxu0 0
        %1193 = vmatprep.mubr.bf16.mxu0 0
        %1194 = vmatmul.mubr.bf16.gmra.mxu0 %v1155
        %v1195 = vpop.f32.mrf.mxu0
        %v1196 = vadd.f32 0.0, %v1195
        %v1197 = vpop.f32.mrf.mxu0
        %v1198 = vpop.f32.mrf.mxu0
        %v1199 = vpop.f32.mrf.mxu0
        %1200 = vdwg.mxu0
        %v1202 = vsel %vm910, %v1151, 0
        %v1205 = vsel %vm1157, %v907, 0
        %1207 = vmatprep.subr.bf16.mxu0 0
        %1208 = vmatpush1.bf16.msra.mxu0 0
        %1209 = vmatprep.subr.bf16.mxu0 0
        %1210 = vmatpush1.bf16.msra.mxu0 0
        %1211 = vmatprep.subr.bf16.mxu0 0
        %1212 = vmatpush1.bf16.msra.mxu0 0
        %1213 = vmatprep.subr.bf16.mxu0 0
        %1214 = vmatpush1.bf16.msra.mxu0 0
        %1215 = vmatprep.subr.bf16.mxu0 0
        %1216 = vmatpush1.bf16.msra.mxu0 0
        %1217 = vmatprep.subr.bf16.mxu0 0
        %1218 = vmatpush1.bf16.msra.mxu0 0
        %1219 = vmatprep.subr.bf16.mxu0 0
        %1220 = vmatpush1.bf16.msra.mxu0 0
        %1221 = vmatprep.subr.bf16.mxu0 0
        %1222 = vmatpush1.bf16.msra.mxu0 %v1205
        %1223 = vmatprep.subr.bf16.mxu0 0
        %1224 = vmatpush2.bf16.msra.mxu0 0
        %1225 = vmatprep.subr.bf16.mxu0 0
        %1226 = vmatpush2.bf16.msra.mxu0 0
        %1227 = vmatprep.subr.bf16.mxu0 0
        %1228 = vmatpush2.bf16.msra.mxu0 0
        %1229 = vmatprep.subr.bf16.mxu0 0
        %1230 = vmatpush2.bf16.msra.mxu0 0
        %1231 = vmatprep.subr.bf16.mxu0 0
        %1232 = vmatpush2.bf16.msra.mxu0 0
        %1233 = vmatprep.subr.bf16.mxu0 0
        %1234 = vmatpush2.bf16.msra.mxu0 0
        %1235 = vmatprep.subr.bf16.mxu0 0
        %1236 = vmatpush2.bf16.msra.mxu0 0
        %1237 = vmatprep.subr.bf16.mxu0 0
        %1238 = vmatpush2.bf16.msra.mxu0 0
        %1239 = vmatprep.mubr.bf16.mxu0 0
        %1240 = vmatmul.mubr.bf16.gmra.mxu0 %v1202
        %v1241 = vpop.f32.mrf.mxu0
        %v1242 = vadd.f32 0.0, %v1241
        %v1243 = vpop.f32.mrf.mxu0
        %v1244 = vpop.f32.mrf.mxu0
        %v1245 = vpop.f32.mrf.mxu0
        %1246 = vdwg.mxu0
        %v1248 = vsel %vm910, %v1152, 0
        %v1251 = vsel %vm1157, %v908, 0
        %1253 = vmatprep.subr.bf16.mxu0 0
        %1254 = vmatpush1.bf16.msra.mxu0 0
        %1255 = vmatprep.subr.bf16.mxu0 0
        %1256 = vmatpush1.bf16.msra.mxu0 0
        %1257 = vmatprep.subr.bf16.mxu0 0
        %1258 = vmatpush1.bf16.msra.mxu0 0
        %1259 = vmatprep.subr.bf16.mxu0 0
        %1260 = vmatpush1.bf16.msra.mxu0 0
        %1261 = vmatprep.subr.bf16.mxu0 0
        %1262 = vmatpush1.bf16.msra.mxu0 0
        %1263 = vmatprep.subr.bf16.mxu0 0
        %1264 = vmatpush1.bf16.msra.mxu0 0
        %1265 = vmatprep.subr.bf16.mxu0 0
        %1266 = vmatpush1.bf16.msra.mxu0 0
        %1267 = vmatprep.subr.bf16.mxu0 0
        %1268 = vmatpush1.bf16.msra.mxu0 %v1251
        %1269 = vmatprep.subr.bf16.mxu0 0
        %1270 = vmatpush2.bf16.msra.mxu0 0
        %1271 = vmatprep.subr.bf16.mxu0 0
        %1272 = vmatpush2.bf16.msra.mxu0 0
        %1273 = vmatprep.subr.bf16.mxu0 0
        %1274 = vmatpush2.bf16.msra.mxu0 0
        %1275 = vmatprep.subr.bf16.mxu0 0
        %1276 = vmatpush2.bf16.msra.mxu0 0
        %1277 = vmatprep.subr.bf16.mxu0 0
        %1278 = vmatpush2.bf16.msra.mxu0 0
        %1279 = vmatprep.subr.bf16.mxu0 0
        %1280 = vmatpush2.bf16.msra.mxu0 0
        %1281 = vmatprep.subr.bf16.mxu0 0
        %1282 = vmatpush2.bf16.msra.mxu0 0
        %1283 = vmatprep.subr.bf16.mxu0 0
        %1284 = vmatpush2.bf16.msra.mxu0 0
        %1285 = vmatprep.mubr.bf16.mxu0 0
        %1286 = vmatmul.mubr.bf16.gmra.mxu0 %v1248
        %v1287 = vpop.f32.mrf.mxu0
        %v1288 = vadd.f32 0.0, %v1287
        %v1289 = vpop.f32.mrf.mxu0
        %v1290 = vpop.f32.mrf.mxu0
        %v1291 = vpop.f32.mrf.mxu0
        %1292 = vdwg.mxu0
        %v1294 = vsel %vm910, %v1153, 0
        %v1297 = vsel %vm1157, %v909, 0
        %1299 = vmatprep.subr.bf16.mxu0 0
        %1300 = vmatpush1.bf16.msra.mxu0 0
        %1301 = vmatprep.subr.bf16.mxu0 0
        %1302 = vmatpush1.bf16.msra.mxu0 0
        %1303 = vmatprep.subr.bf16.mxu0 0
        %1304 = vmatpush1.bf16.msra.mxu0 0
        %1305 = vmatprep.subr.bf16.mxu0 0
        %1306 = vmatpush1.bf16.msra.mxu0 0
        %1307 = vmatprep.subr.bf16.mxu0 0
        %1308 = vmatpush1.bf16.msra.mxu0 0
        %1309 = vmatprep.subr.bf16.mxu0 0
        %1310 = vmatpush1.bf16.msra.mxu0 0
        %1311 = vmatprep.subr.bf16.mxu0 0
        %1312 = vmatpush1.bf16.msra.mxu0 0
        %1313 = vmatprep.subr.bf16.mxu0 0
        %1314 = vmatpush1.bf16.msra.mxu0 %v1297
        %1315 = vmatprep.subr.bf16.mxu0 0
        %1316 = vmatpush2.bf16.msra.mxu0 0
        %1317 = vmatprep.subr.bf16.mxu0 0
        %1318 = vmatpush2.bf16.msra.mxu0 0
        %1319 = vmatprep.subr.bf16.mxu0 0
        %1320 = vmatpush2.bf16.msra.mxu0 0
        %1321 = vmatprep.subr.bf16.mxu0 0
        %1322 = vmatpush2.bf16.msra.mxu0 0
        %1323 = vmatprep.subr.bf16.mxu0 0
        %1324 = vmatpush2.bf16.msra.mxu0 0
        %1325 = vmatprep.subr.bf16.mxu0 0
        %1326 = vmatpush2.bf16.msra.mxu0 0
        %1327 = vmatprep.subr.bf16.mxu0 0
        %1328 = vmatpush2.bf16.msra.mxu0 0
        %1329 = vmatprep.subr.bf16.mxu0 0
        %1330 = vmatpush2.bf16.msra.mxu0 0
        %1331 = vmatprep.mubr.bf16.mxu0 0
        %1332 = vmatmul.mubr.bf16.gmra.mxu0 %v1294
        %v1333 = vpop.f32.mrf.mxu0
        %v1334 = vadd.f32 0.0, %v1333
        %v1335 = vpop.f32.mrf.mxu0
        %v1336 = vpop.f32.mrf.mxu0
        %v1337 = vpop.f32.mrf.mxu0
        %1338 = vdwg.mxu0
        %v1339 = vcombine.low %v1196, %v1288
        %v1340 = vcombine.high %v1196, %v1288
        %v1342 = vunpack.c.l.s4 1983009808
        %v1343 = vunpack.c.0.s8 %v1342
        %v1344 = vlaneseq
        %v1345 = vshrl.u32 %v1344, 7
        %v1346 = vsub.s32 %v1343, %v1345
        %v1347 = vrot.slane %v1339, %v1346
        %v1349 = vunpack.c.l.s4 1983009808
        %v1350 = vunpack.c.0.s8 %v1349
        %v1351 = vlaneseq
        %v1352 = vshrl.u32 %v1351, 7
        %v1353 = vsub.s32 %v1350, %v1352
        %v1354 = vrot.slane %v1340, %v1353
        %v1355 = vcombine.low %v1242, %v1334
        %v1356 = vcombine.high %v1242, %v1334
        %v1358 = vunpack.c.l.s4 1983009808
        %v1359 = vunpack.c.0.s8 %v1358
        %v1360 = vlaneseq
        %v1361 = vshrl.u32 %v1360, 7
        %v1362 = vsub.s32 %v1359, %v1361
        %v1363 = vrot.slane %v1355, %v1362
        %v1365 = vunpack.c.l.s4 1983009808
        %v1366 = vunpack.c.0.s8 %v1365
        %v1367 = vlaneseq
        %v1368 = vshrl.u32 %v1367, 7
        %v1369 = vsub.s32 %v1366, %v1368
        %v1370 = vrot.slane %v1356, %v1369
        %v1371 = vcombine.low %v1347, %v1363
        %v1372 = vcombine.high %v1347, %v1363
        %v1374 = vunpack.c.l.s4 1934713408
        %v1375 = vunpack.c.0.s8 %v1374
        %v1376 = vlaneseq
        %v1377 = vshrl.u32 %v1376, 7
        %v1378 = vsub.s32 %v1375, %v1377
        %v1379 = vrot.slane %v1371, %v1378
        %v1381 = vunpack.c.l.s4 1934713408
        %v1382 = vunpack.c.0.s8 %v1381
        %v1383 = vlaneseq
        %v1384 = vshrl.u32 %v1383, 7
        %v1385 = vsub.s32 %v1382, %v1384
        %v1386 = vrot.slane %v1372, %v1385
        %v1387 = vcombine.low %v1354, %v1370
        %v1388 = vcombine.high %v1354, %v1370
        %v1390 = vunpack.c.l.s4 1934713408
        %v1391 = vunpack.c.0.s8 %v1390
        %v1392 = vlaneseq
        %v1393 = vshrl.u32 %v1392, 7
        %v1394 = vsub.s32 %v1391, %v1393
        %v1395 = vrot.slane %v1387, %v1394
        %v1397 = vunpack.c.l.s4 1934713408
        %v1398 = vunpack.c.0.s8 %v1397
        %v1399 = vlaneseq
        %v1400 = vshrl.u32 %v1399, 7
        %v1401 = vsub.s32 %v1398, %v1400
        %v1402 = vrot.slane %v1388, %v1401
        %v1403 = vcombine.high %v1379, 0.0
        %v1404 = vcombine.high %v1386, 0.0
        %v1405 = vcombine.high %v1395, 0.0
        %v1406 = vcombine.high %v1402, 0.0
        %v1407 = vcombine.low %v1379, %v1386
        %v1409 = vunpack.c.l.s4 1983009808
        %v1410 = vunpack.c.0.s8 %v1409
        %v1411 = vlaneseq
        %v1412 = vshrl.u32 %v1411, 7
        %v1413 = vsub.s32 %v1410, %v1412
        %v1414 = vrot.slane %v1407, %v1413
        %v1415 = vcombine.low %v1403, %v1404
        %v1417 = vunpack.c.l.s4 1983009808
        %v1418 = vunpack.c.0.s8 %v1417
        %v1419 = vlaneseq
        %v1420 = vshrl.u32 %v1419, 7
        %v1421 = vsub.s32 %v1418, %v1420
        %v1422 = vrot.slane %v1415, %v1421
        %v1423 = vcombine.low %v1395, %v1402
        %v1425 = vunpack.c.l.s4 1983009808
        %v1426 = vunpack.c.0.s8 %v1425
        %v1427 = vlaneseq
        %v1428 = vshrl.u32 %v1427, 7
        %v1429 = vsub.s32 %v1426, %v1428
        %v1430 = vrot.slane %v1423, %v1429
        %v1431 = vcombine.low %v1405, %v1406
        %v1433 = vunpack.c.l.s4 1983009808
        %v1434 = vunpack.c.0.s8 %v1433
        %v1435 = vlaneseq
        %v1436 = vshrl.u32 %v1435, 7
        %v1437 = vsub.s32 %v1434, %v1436
        %v1438 = vrot.slane %v1431, %v1437
        %v1439 = vcombine.low %v1414, %v1422
        %v1440 = vcombine.high %v1414, %v1422
        %v1442 = vunpack.c.l.s4 1934713408
        %v1443 = vunpack.c.0.s8 %v1442
        %v1444 = vlaneseq
        %v1445 = vshrl.u32 %v1444, 7
        %v1446 = vsub.s32 %v1443, %v1445
        %v1447 = vrot.slane %v1439, %v1446
        %v1449 = vunpack.c.l.s4 1934713408
        %v1450 = vunpack.c.0.s8 %v1449
        %v1451 = vlaneseq
        %v1452 = vshrl.u32 %v1451, 7
        %v1453 = vsub.s32 %v1450, %v1452
        %v1454 = vrot.slane %v1440, %v1453
        %v1455 = vcombine.low %v1430, %v1438
        %v1456 = vcombine.high %v1430, %v1438
        %v1458 = vunpack.c.l.s4 1934713408
        %v1459 = vunpack.c.0.s8 %v1458
        %v1460 = vlaneseq
        %v1461 = vshrl.u32 %v1460, 7
        %v1462 = vsub.s32 %v1459, %v1461
        %v1463 = vrot.slane %v1455, %v1462
        %v1465 = vunpack.c.l.s4 1934713408
        %v1466 = vunpack.c.0.s8 %v1465
        %v1467 = vlaneseq
        %v1468 = vshrl.u32 %v1467, 7
        %v1469 = vsub.s32 %v1466, %v1468
        %v1470 = vrot.slane %v1456, %v1469
        %v1471 = vcombine.low %v1447, %v1463
        %v1472 = vcombine.high %v1447, %v1463
        %v1473 = vcombine.low %v1454, %v1470
        %v1474 = vcombine.high %v1454, %v1470
        %1476 = vrot.lane.b32.xlu0 %v1472, 8
        %v1477 = vpop.permute.xlu0 %1476
        %1480 = vrot.lane.b32.xlu0 %v1473, 16
        %v1481 = vpop.permute.xlu0 %1480
        %1484 = vrot.lane.b32.xlu0 %v1474, 24
        %v1485 = vpop.permute.xlu0 %1484
        %v1487 = vsel %vm910, %v1471, %v1477
        %vm1488 = vcmask 130048
        %v1489 = vsel %vm1488, %v1487, %v1481
        %vm1490 = vcmask 195584
        %v1491 = vsel %vm1490, %v1489, %v1485
        %v1492 = vadd.f32 %v356, %v1491
        %v1493 = vld [vmem:[%s4] sm:$0x1]
        %v1494 = vld [vmem:[%s5] sm:$0x1]
        %v1495 = vsel %vm359, %v1492, 0.0
        %1496 = vadd.xlane.f32.xlu0 %v1495
        %v1497 = vpop.xlane.xlu0 %1496
        %v1498 = vmul.f32 %v1497, %v363
        %v1499 = vsub.f32 %v1492, %v1498
        %v1500 = vmul.f32 %v1499, %v1499
        %v1501 = vsel %vm359, %v1500, 0.0
        %1502 = vadd.xlane.f32.xlu0 %v1501
        %v1503 = vpop.xlane.xlu0 %1502
        %v1504 = vmul.f32 %v1503, %v363
        %v1505 = vadd.f32 %v1504, 1e-05
        %v1506 = vrsqrt.pop %v1505
        %v1507 = vmul.f32 %v1499, %v1506
        %v1509 = vlaneseq
        %v1510 = vshrl.u32 %v1509, 7
        %v1511 = vsub.s32 0, %v1510
        %v1512 = vrot.slane %v1493, %v1511
        %v1514 = vmul.f32 %v1512, %v1507
        %v1516 = vlaneseq
        %v1517 = vshrl.u32 %v1516, 7
        %v1518 = vsub.s32 0, %v1517
        %v1519 = vrot.slane %v1494, %v1518
        %v1521 = vadd.f32 %v1514, %v1519
        %v1522 = vpack.c.bf16 %v1521, %v1521
        %v1523 = vld [vmem:[%s6] sm:$0xf]
        %v1524 = vld [vmem:[%s6 + $0x4] sm:$0xf]
        %v1525 = vld [vmem:[%s6 + $0x8] sm:$0xf]
        %v1526 = vld [vmem:[%s6 + $0xc] sm:$0xf]
        %v1527 = vld [vmem:[%s7] sm:$0x1]
        %v1529 = vlaneseq
        %v1530 = vshrl.u32 %v1529, 7
        %v1531 = vsub.s32 0, %v1530
        %v1532 = vrot.slane %v1527, %v1531
        %v1538 = vunpack.c.l.b16 %v1523
        %v1539 = vunpack.c.l.b16 %v1524
        %v1540 = vunpack.c.l.b16 %v1525
        %v1541 = vunpack.c.l.b16 %v1526
        %v1542 = vpack.c.b16 %v1539, %v1538
        %v1543 = vpack.c.b16 %v1541, %v1540
        %v1547 = vsel %vm359, %v1522, 0
        %1549 = vmatprep.subr.bf16.mxu0 0
        %1550 = vmatpush1.bf16.msra.mxu0 0
        %1551 = vmatprep.subr.bf16.mxu0 0
        %1552 = vmatpush1.bf16.msra.mxu0 0
        %1553 = vmatprep.subr.bf16.mxu0 0
        %1554 = vmatpush1.bf16.msra.mxu0 0
        %1555 = vmatprep.subr.bf16.mxu0 0
        %1556 = vmatpush1.bf16.msra.mxu0 0
        %1557 = vmatprep.subr.bf16.mxu0 0
        %1558 = vmatpush1.bf16.msra.mxu0 0
        %1559 = vmatprep.subr.bf16.mxu0 0
        %1560 = vmatpush1.bf16.msra.mxu0 0
        %1561 = vmatprep.subr.bf16.mxu0 0
        %1562 = vmatpush1.bf16.msra.mxu0 %v1543
        %1563 = vmatprep.subr.bf16.mxu0 0
        %1564 = vmatpush1.bf16.msra.mxu0 %v1542
        %1565 = vmatprep.subr.bf16.mxu0 0
        %1566 = vmatpush2.bf16.msra.mxu0 0
        %1567 = vmatprep.subr.bf16.mxu0 0
        %1568 = vmatpush2.bf16.msra.mxu0 0
        %1569 = vmatprep.subr.bf16.mxu0 0
        %1570 = vmatpush2.bf16.msra.mxu0 0
        %1571 = vmatprep.subr.bf16.mxu0 0
        %1572 = vmatpush2.bf16.msra.mxu0 0
        %1573 = vmatprep.subr.bf16.mxu0 0
        %1574 = vmatpush2.bf16.msra.mxu0 0
        %1575 = vmatprep.subr.bf16.mxu0 0
        %1576 = vmatpush2.bf16.msra.mxu0 0
        %1577 = vmatprep.subr.bf16.mxu0 0
        %1578 = vmatpush2.bf16.msra.mxu0 0
        %1579 = vmatprep.subr.bf16.mxu0 0
        %1580 = vmatpush2.bf16.msra.mxu0 0
        %1581 = vmatprep.mubr.bf16.mxu0 0
        %1582 = vmatmul.mubr.bf16.gmra.mxu0 %v1547
        %v1583 = vpop.f32.mrf.mxu0
        %v1584 = vadd.f32 %v1532, %v1583
        %v1585 = vpop.f32.mrf.mxu0
        %v1586 = vpop.f32.mrf.mxu0
        %v1587 = vpop.f32.mrf.mxu0
        %1588 = vdwg.mxu0
        %v1589 = vmul.f32 %v1584, 0.5
        %v1590 = vmul.f32 %v1584, 0.044715
        %v1591 = vmul.f32 %v1590, %v1584
        %v1592 = vmul.f32 %v1591, %v1584
        %v1593 = vadd.f32 %v1584, %v1592
        %v1594 = vmul.f32 %v1593, 0.7978845
        %v1595 = vtanh.pop %v1594
        %v1596 = vadd.f32 %v1595, 1.0
        %v1597 = vmul.f32 %v1589, %v1596
        %v1598 = vpack.c.bf16 %v1597, %v1597
        %v1599 = vld [vmem:[%s8] sm:$0xf]
        %v1600 = vld [vmem:[%s8 + $0x4] sm:$0xf]
        %v1601 = vld [vmem:[%s8 + $0x8] sm:$0xf]
        %v1602 = vld [vmem:[%s8 + $0xc] sm:$0xf]
        %v1603 = vld [vmem:[%s8 + $0x10] sm:$0xf]
        %v1604 = vld [vmem:[%s8 + $0x14] sm:$0xf]
        %v1605 = vld [vmem:[%s8 + $0x18] sm:$0xf]
        %v1606 = vld [vmem:[%s8 + $0x1c] sm:$0xf]
        %v1607 = vld [vmem:[%s8 + $0x20] sm:$0xf]
        %v1608 = vld [vmem:[%s8 + $0x24] sm:$0xf]
        %v1609 = vld [vmem:[%s8 + $0x28] sm:$0xf]
        %v1610 = vld [vmem:[%s8 + $0x2c] sm:$0xf]
        %v1611 = vld [vmem:[%s8 + $0x30] sm:$0xf]
        %v1612 = vld [vmem:[%s8 + $0x34] sm:$0xf]
        %v1613 = vld [vmem:[%s8 + $0x38] sm:$0xf]
        %v1614 = vld [vmem:[%s8 + $0x3c] sm:$0xf]
        %v1631 = vunpack.c.l.b16 %v1599
        %v1632 = vunpack.c.l.b16 %v1600
        %v1633 = vunpack.c.l.b16 %v1601
        %v1634 = vunpack.c.l.b16 %v1602
        %v1635 = vunpack.c.l.b16 %v1603
        %v1636 = vunpack.c.l.b16 %v1604
        %v1637 = vunpack.c.l.b16 %v1605
        %v1638 = vunpack.c.l.b16 %v1606
        %v1639 = vunpack.c.l.b16 %v1607
        %v1640 = vunpack.c.l.b16 %v1608
        %v1641 = vunpack.c.l.b16 %v1609
        %v1642 = vunpack.c.l.b16 %v1610
        %v1643 = vunpack.c.l.b16 %v1611
        %v1644 = vunpack.c.l.b16 %v1612
        %v1645 = vunpack.c.l.b16 %v1613
        %v1646 = vunpack.c.l.b16 %v1614
        %v1647 = vpack.c.b16 %v1632, %v1631
        %v1648 = vpack.c.b16 %v1634, %v1633
        %v1649 = vpack.c.b16 %v1636, %v1635
        %v1650 = vpack.c.b16 %v1638, %v1637
        %v1651 = vpack.c.b16 %v1640, %v1639
        %v1652 = vpack.c.b16 %v1642, %v1641
        %v1653 = vpack.c.b16 %v1644, %v1643
        %v1654 = vpack.c.b16 %v1646, %v1645
        %1663 = vmatprep.subr.bf16.mxu0 0
        %1664 = vmatpush1.bf16.msra.mxu0 %v1654
        %1665 = vmatprep.subr.bf16.mxu0 0
        %1666 = vmatpush1.bf16.msra.mxu0 %v1653
        %1667 = vmatprep.subr.bf16.mxu0 0
        %1668 = vmatpush1.bf16.msra.mxu0 %v1652
        %1669 = vmatprep.subr.bf16.mxu0 0
        %1670 = vmatpush1.bf16.msra.mxu0 %v1651
        %1671 = vmatprep.subr.bf16.mxu0 0
        %1672 = vmatpush1.bf16.msra.mxu0 %v1650
        %1673 = vmatprep.subr.bf16.mxu0 0
        %1674 = vmatpush1.bf16.msra.mxu0 %v1649
        %1675 = vmatprep.subr.bf16.mxu0 0
        %1676 = vmatpush1.bf16.msra.mxu0 %v1648
        %1677 = vmatprep.subr.bf16.mxu0 0
        %1678 = vmatpush1.bf16.msra.mxu0 %v1647
        %1679 = vmatprep.subr.bf16.mxu0 0
        %1680 = vmatpush2.bf16.msra.mxu0 0
        %1681 = vmatprep.subr.bf16.mxu0 0
        %1682 = vmatpush2.bf16.msra.mxu0 0
        %1683 = vmatprep.subr.bf16.mxu0 0
        %1684 = vmatpush2.bf16.msra.mxu0 0
        %1685 = vmatprep.subr.bf16.mxu0 0
        %1686 = vmatpush2.bf16.msra.mxu0 0
        %1687 = vmatprep.subr.bf16.mxu0 0
        %1688 = vmatpush2.bf16.msra.mxu0 0
        %1689 = vmatprep.subr.bf16.mxu0 0
        %1690 = vmatpush2.bf16.msra.mxu0 0
        %1691 = vmatprep.subr.bf16.mxu0 0
        %1692 = vmatpush2.bf16.msra.mxu0 0
        %1693 = vmatprep.subr.bf16.mxu0 0
        %1694 = vmatpush2.bf16.msra.mxu0 0
        %1695 = vmatprep.mubr.bf16.mxu0 0
        %1696 = vmatmul.mubr.bf16.gmra.mxu0 %v1598
        %v1697 = vpop.f32.mrf.mxu0
        %v1698 = vadd.f32 0.0, %v1697
        %v1699 = vpop.f32.mrf.mxu0
        %v1700 = vpop.f32.mrf.mxu0
        %v1701 = vpop.f32.mrf.mxu0
        %1702 = vdwg.mxu0
        %v1703 = vadd.f32 %v1492, %v1698
        %v1704 = vld [vmem:[%s9] sm:$0x1]
        %v1706 = vlaneseq
        %v1707 = vshrl.u32 %v1706, 7
        %v1708 = vsub.s32 0, %v1707
        %v1709 = vrot.slane %v1704, %v1708
        %v1711 = vadd.f32 %v1703, %v1709
        %v1712 = vpack.c.bf16 %v1711, %v1711
        %vm1713 = vcmask 257024
        %1714 = vst.msk [vmem:[%s350] sm:$0xf] %vm1713, %v1712
        %s1715 = sand.u32 %s247, 1
        %s1716 = scalar_lea.sflag [#allocation3], %s1715
        %s1717 = sand.u32 %s247, 1
        %s1718 = smul.addr %s1717, 4
        %s1719 = scalar_lea.vmem [#allocation2], %s1718
        // Predicated region
        $region61: #{tpu_custom_call.1} parent=59 // pred_check
          %p1720 = pneg %p257
        $region62: #{tpu_custom_call.1} parent=59 // pred_check_branch
          %1722 = sbr.rel (%p1720) target = $region64
        $region63: #{tpu_custom_call.1} parent=59 // pred_region
          %s1724 = ssub.s32 64, 64
          %1725 = vsyncadd %s1716, %s1724
          %s1726 = smul.addr %s24, 64
          %s1727 = scalar_lea.hbm %s10, %s1726
          %s1729 = sshll.u32 %s1719, 4
          %s1730 = int_to_ptr.vmem [resolvable:$true] %s1729
          %1732 = dma.vmem_to_hbm [thread:$0]  %s1730, 64, %s1727, %s1716
        $region64: #{tpu_custom_call.1} parent=59 // pred_fallthru
          _
      $region60: #{tpu_custom_call.1} parent=5 // pred_fallthru
        _
      %p1733 = scmp.le.s32.totalorder 2, %s19
      // Predicated region
      $region65: #{tpu_custom_call.1} parent=5 // pred_check
        %p1734 = pneg %p1733
      $region66: #{tpu_custom_call.1} parent=5 // pred_check_branch
        %1736 = sbr.rel (%p1734) target = $region68
      $region67: #{tpu_custom_call.1} parent=5 // pred_region
        %s1737 = ssub.s32 %s19, 2
        // Predicated region
        $region69: #{tpu_custom_call.1} parent=67 // pred_check
          %p1738 = pneg %p263
        $region70: #{tpu_custom_call.1} parent=67 // pred_check_branch
          %1740 = sbr.rel (%p1738) target = $region72
        $region71: #{tpu_custom_call.1} parent=67 // pred_region
          %s1741 = sand.u32 %s248, 1
          %s1742 = scalar_lea.sflag [#allocation3], %s1741
          %s1743 = sand.u32 %s248, 1
          %s1744 = smul.addr %s1743, 4
          %s1745 = scalar_lea.vmem [#allocation2], %s1744
          %1746 = dma.done %s1742, 64
        $region72: #{tpu_custom_call.1} parent=67 // pred_fallthru
          _
      $region68: #{tpu_custom_call.1} parent=5 // pred_fallthru
        _
    $region6: #{tpu_custom_call.1} parent=1 // loop_footer
      %s23 = sadd.s32 1, %s19
    $region7: #{tpu_custom_call.1} parent=1 // loop_footer_branch
      %18 = sbr.rel target = $region3
    $region8: #{tpu_custom_call.1} parent=1 // loop_exit
      _
    %1747 = vsyncpa [#allocation3], 1
    %s1748 = scalar_lea.sflag [#allocation3], 1
    %1749 = vsyncpa %s1748, 1

</llo_original>
